<compile_context>
chip_gen: v6e
topology: v6e:2x2x1
jax: 0.10.0
libtpu: 0.0.40
codegen_flags: <defaults>
</compile_context>

<pallas_src>
import functools

import numpy as np
import jax
import jax.numpy as jnp
from jax.experimental import pallas as pl
from jax.experimental.pallas import tpu as pltpu


def _triplet_loss_kernel(idx_ref, x_hbm_ref, out_ref,
                         x_vmem, hacc_ref, load_sem,
                         *, margin, n_valid):
    """One grid step: one (TILE_T, 3) tile of triplet indices.

    idx_ref   : VMEM (TILE_T, 3) int32 — (anchor, positive, negative) row ids
    x_hbm_ref : ANY  (Bp, Dp)          — zero-padded embeddings (HBM, copied once)
    out_ref   : VMEM (1, 1)      f32   — mean triplet loss (written at last step)
    x_vmem    : VMEM (Bp, Dp)          — resident embedding block (single buffer)
    hacc_ref  : VMEM (TILE_T, 1) f32   — per-row running hinge sums
    load_sem  : DMA semaphore for the one-time embedding copy
    """
    pid = pl.program_id(0)
    nsteps = pl.num_programs(0)

    @pl.when(pid == 0)
    def _init():
        # One-time stage of the (padded) embedding matrix into VMEM; it stays
        # resident (no double buffering) for all grid steps.
        cp = pltpu.make_async_copy(x_hbm_ref, x_vmem, load_sem)
        cp.start()
        cp.wait()
        hacc_ref[...] = jnp.zeros_like(hacc_ref)

    x = x_vmem[...]                                    # (Bp, Dp) bf16/f32
    idx = idx_ref[...]                                 # (Tt, 3) int32
    tile_t = idx.shape[0]
    b_pad = x.shape[0]

    ia = idx[:, 0:1]                                   # (Tt, 1)
    ip = idx[:, 1:2]
    ineg = idx[:, 2:3]

    # One lane iota, combined selectors built directly in the matmul dtype
    # (values in {-2,...,2} are exactly representable in bf16).
    cols = jax.lax.broadcasted_iota(jnp.int32, (tile_t, b_pad), 1)
    oa = (cols == ia).astype(x.dtype)
    op = (cols == ip).astype(x.dtype)
    on = (cols == ineg).astype(x.dtype)
    sel_u = on - op                                    # selects (n - p)
    sel_v = (oa + oa) - op - on                        # selects (2a - p - n)
    sel = jnp.concatenate([sel_u, sel_v], axis=0)      # (2*Tt, Bp)

    # Single stacked MXU pass (fused gather + difference), f32 accumulation:
    #   |a-p|^2 - |a-n|^2 = sum((n - p) * (2a - p - n))
    uv = jnp.dot(sel, x, preferred_element_type=jnp.float32)   # (2*Tt, Dp) f32
    u = uv[:tile_t, :]
    v = uv[tile_t:, :]

    d = jnp.sum(u * v, axis=-1, keepdims=True)         # (Tt, 1) — one XLU reduce
    hinge = jnp.maximum(d + margin, 0.0)                # F.relu(. + margin)

    # Mask padded triplet rows (each would otherwise contribute relu(margin)).
    row = pid * tile_t + jax.lax.broadcasted_iota(jnp.int32, (tile_t, 1), 0)
    hinge = jnp.where(row < n_valid, hinge, 0.0)

    # Cheap per-step VPU add into a wide accumulator; reduce/scale/store only
    # once, at the final grid step.
    hacc_ref[...] += hinge

    @pl.when(pid == nsteps - 1)
    def _finish():
        total = jnp.sum(hacc_ref[...], axis=0, keepdims=True)   # (1, 1)
        out_ref[...] = total * (1.0 / n_valid)          # torch.mean over T


def triplet_loss_pallas(batch_emb, triplets, margin, *, tile_t=256,
                        compute_dtype=jnp.bfloat16):
    """batch_emb: (B, D) float embeddings; triplets: (T, 3) int indices
    (anchor, positive, negative); margin: python float.  Returns the scalar
    loss matching torch.mean(stack([relu(|a-p|^2 - |a-n|^2 + margin)])).

    compute_dtype: dtype of the resident embeddings / selection matmul
    (bf16 default for MXU throughput; pass jnp.float32 for an f32 path)."""
    batch_emb = jnp.asarray(batch_emb, dtype=jnp.float32)
    triplets = jnp.asarray(triplets, dtype=jnp.int32)
    B, D = batch_emb.shape
    T = int(triplets.shape[0])
    if T == 0:
        # torch.stack([]) would raise upstream; mean of empty would be NaN.
        raise ValueError("triplet loss requires at least one sampled triplet")
    assert tile_t % 16 == 0, "tile_t must be a multiple of 16 (bf16 sublane tile)"

    # Lane/sublane-dense zero padding (zeros do not change squared distances).
    d_pad = pl.cdiv(D, 128) * 128      # lanes
    b_pad = pl.cdiv(B, 128) * 128      # MXU-aligned contraction dim
    t_pad = pl.cdiv(T, tile_t) * tile_t

    x = jnp.pad(batch_emb, ((0, b_pad - B), (0, d_pad - D))).astype(compute_dtype)
    idx = jnp.pad(triplets, ((0, t_pad - T), (0, 0)))

    grid = (t_pad // tile_t,)
    kernel = functools.partial(_triplet_loss_kernel, margin=float(margin), n_valid=T)

    # Explicit VMEM budget: single resident x buffer + idx double-buffer +
    # selector/uv temporaries + accumulators, with headroom.
    cbytes = jnp.dtype(compute_dtype).itemsize
    vmem_bytes = (
        b_pad * d_pad * cbytes          # resident embeddings (single buffer)
        + 2 * tile_t * 128 * 4          # idx tiles (lane-padded), double-buffered
        + 6 * tile_t * b_pad * cbytes   # selector build temporaries
        + 4 * tile_t * d_pad * 4        # uv + u*v (f32)
        + 2 * tile_t * 128 * 4          # hinge / accumulator (lane-padded)
    )
    vmem_limit = int(min(64 << 20, 2 * vmem_bytes + (8 << 20)))

    out = pl.pallas_call(
        kernel,
        out_shape=jax.ShapeDtypeStruct((1, 1), jnp.float32),
        grid_spec=pltpu.PrefetchScalarGridSpec(
            num_scalar_prefetch=0,
            grid=grid,
            in_specs=[
                # triplet index tile — walks over T (auto-pipelined)
                pl.BlockSpec((tile_t, 3), lambda i: (i, 0)),
                # full embedding matrix — left in place, copied once in-kernel
                pl.BlockSpec(memory_space=pl.ANY),
            ],
            out_specs=pl.BlockSpec((1, 1), lambda i: (0, 0)),
            scratch_shapes=[
                pltpu.VMEM((b_pad, d_pad), compute_dtype),   # resident x
                pltpu.VMEM((tile_t, 1), jnp.float32),        # per-row hinge acc
                pltpu.SemaphoreType.DMA,                     # one-time load sem
            ],
        ),
        compiler_params=pltpu.CompilerParams(
            dimension_semantics=("arbitrary",),   # running-sum (reduction) axis
            vmem_limit_bytes=vmem_limit,
        ),
    )(idx, x)
    return out[0, 0]


def _simple_batchminer(labels, seed=0):
    """Deterministic stand-in for the random triplet batchminer: for each
    anchor i, pick a positive with the same label and a negative with a
    different label."""
    rng = np.random.RandomState(seed)
    labels = np.asarray(labels)
    triplets = []
    for i in range(len(labels)):
        pos_pool = np.where((labels == labels[i]) & (np.arange(len(labels)) != i))[0]
        neg_pool = np.where(labels != labels[i])[0]
        if len(pos_pool) == 0 or len(neg_pool) == 0:
            continue
        j = int(rng.choice(pos_pool))
        k = int(rng.choice(neg_pool))
        triplets.append((i, j, k))
    return np.asarray(triplets, dtype=np.int32)


if __name__ == "__main__":
    # Small shapes consistent with the module: a batch of (B, D) embeddings.
    B, D = 32, 48
    margin = 0.2  # args.loss_triplet_margin

    key = jax.random.PRNGKey(0)
    batch_emb = jax.random.normal(key, (B, D), dtype=jnp.float32)
    labels = np.repeat(np.arange(8), 4).astype(np.int32)

    triplets = jnp.asarray(_simple_batchminer(labels, seed=0))   # (32, 3)

    # Pure-JAX references mirroring the torch module exactly.
    def ref_loss(x):
        a = x[triplets[:, 0]]
        p = x[triplets[:, 1]]
        n = x[triplets[:, 2]]
        return jnp.mean(
            jnp.maximum(
                jnp.sum((a - p) ** 2, axis=-1)
                - jnp.sum((a - n) ** 2, axis=-1) + margin,
                0.0,
            )
        )

    ref_f32 = ref_loss(batch_emb)
    # Reference on bf16-rounded embeddings: the bf16 kernel path is exact up to
    # f32 rounding vs this (selectors exact, products exact, f32 accumulation).
    ref_bf16 = ref_loss(batch_emb.astype(jnp.bfloat16).astype(jnp.float32))

    # (1) Default bf16 MXU path — single masked tile (T=32 < 256).
    loss = jax.block_until_ready(triplet_loss_pallas(batch_emb, triplets, margin))
    np.testing.assert_allclose(np.asarray(loss), np.asarray(ref_bf16),
                               rtol=1e-4, atol=1e-5)

    # (2) f32 fallback path vs the f32 reference.
    loss_f32 = jax.block_until_ready(
        triplet_loss_pallas(batch_emb, triplets, margin, compute_dtype=jnp.float32)
    )
    np.testing.assert_allclose(np.asarray(loss_f32), np.asarray(ref_f32),
                               rtol=1e-4, atol=1e-5)

    # (3) Small tile: exercises multi-step grid accumulation (grid of 2).
    loss_small = jax.block_until_ready(
        triplet_loss_pallas(batch_emb, triplets, margin, tile_t=16)
    )
    np.testing.assert_allclose(np.asarray(loss_small), np.asarray(ref_bf16),
                               rtol=1e-4, atol=1e-5)

    print("KERNEL_OK")
</pallas_src>

<mosaic_0001>
module attributes {stable_mosaic.version = 11 : i64} {
  func.func @_triplet_loss_kernel(%arg0: i32, %arg1: memref<256x3xi32, #tpu.memory_space<vmem>>, %arg2: memref<128x128xbf16, #tpu.memory_space<any>>, %arg3: memref<1x1xf32, #tpu.memory_space<vmem>>, %arg4: memref<128x128xbf16, #tpu.memory_space<vmem>>, %arg5: memref<256x1xf32, #tpu.memory_space<vmem>>, %arg6: memref<!tpu.dma_semaphore, #tpu.memory_space<semaphore_mem>>) attributes {dimension_semantics = [#tpu.dimension_semantics<arbitrary>], iteration_bounds = array<i64: 1>, scalar_prefetch = 0 : i64, scratch_operands = 3 : i64, tpu.core_type = #tpu.core_type<tc>, window_params = [{transform_indices = @transform_0, window_bounds = array<i64: 256, 3>}, {}, {pipeline_mode = #tpu.pipeline_mode<synchronous>, transform_indices = @transform_2, window_bounds = array<i64: 1, 1>}]} {
    %c0_i32 = arith.constant 0 : i32
    %0 = arith.cmpi eq, %arg0, %c0_i32 : i32
    %1 = arith.extui %0 : i1 to i32
    %c0_i32_0 = arith.constant 0 : i32
    %2 = arith.cmpi ne, %1, %c0_i32_0 : i32
    scf.if %2 {
      tpu.enqueue_dma source(%arg2 : memref<128x128xbf16, #tpu.memory_space<any>>) target(%arg4 : memref<128x128xbf16, #tpu.memory_space<vmem>>) target_semaphore(%arg6 : memref<!tpu.dma_semaphore, #tpu.memory_space<semaphore_mem>>)
      tpu.wait_dma2 semaphore(%arg6 : memref<!tpu.dma_semaphore, #tpu.memory_space<semaphore_mem>>) src(%arg2 : memref<128x128xbf16, #tpu.memory_space<any>>) dst(%arg4 : memref<128x128xbf16, #tpu.memory_space<vmem>>)
      %cst_14 = arith.constant 0.000000e+00 : f32
      %53 = vector.broadcast %cst_14 : f32 to vector<256x1xf32>
      %c0_15 = arith.constant 0 : index
      %c0_16 = arith.constant 0 : index
      %54 = vector.load %arg5[%c0_15, %c0_16] : memref<256x1xf32, #tpu.memory_space<vmem>>, vector<256x1xf32>
      tpu.vector_store %arg5[%c0_15, %c0_16], %53 {strides = array<i32>} : memref<256x1xf32, #tpu.memory_space<vmem>>, vector<256x1xf32>,
    } else {
    }
    %c0 = arith.constant 0 : index
    %c0_1 = arith.constant 0 : index
    %3 = vector.load %arg4[%c0, %c0_1] : memref<128x128xbf16, #tpu.memory_space<vmem>>, vector<128x128xbf16>
    %c0_2 = arith.constant 0 : index
    %c0_3 = arith.constant 0 : index
    %4 = vector.load %arg1[%c0_2, %c0_3] : memref<256x3xi32, #tpu.memory_space<vmem>>, vector<256x3xi32>
    %5 = vector.extract_strided_slice %4 {offsets = [0, 0], sizes = [256, 1], strides = [1, 1]} : vector<256x3xi32> to vector<256x1xi32>
    %6 = vector.extract_strided_slice %4 {offsets = [0, 1], sizes = [256, 1], strides = [1, 1]} : vector<256x3xi32> to vector<256x1xi32>
    %7 = vector.extract_strided_slice %4 {offsets = [0, 2], sizes = [256, 1], strides = [1, 1]} : vector<256x3xi32> to vector<256x1xi32>
    %8 = tpu.iota {dimensions = array<i32: 1>} : vector<256x128xi32>
    %9 = vector.broadcast %5 : vector<256x1xi32> to vector<256x128xi32>
    %10 = arith.cmpi eq, %8, %9 : vector<256x128xi32>
    %11 = arith.extui %10 : vector<256x128xi1> to vector<256x128xi32>
    %12 = arith.sitofp %11 : vector<256x128xi32> to vector<256x128xf32>
    %13 = arith.truncf %12 : vector<256x128xf32> to vector<256x128xbf16>
    %14 = vector.broadcast %6 : vector<256x1xi32> to vector<256x128xi32>
    %15 = arith.cmpi eq, %8, %14 : vector<256x128xi32>
    %16 = arith.extui %15 : vector<256x128xi1> to vector<256x128xi32>
    %17 = arith.sitofp %16 : vector<256x128xi32> to vector<256x128xf32>
    %18 = arith.truncf %17 : vector<256x128xf32> to vector<256x128xbf16>
    %19 = vector.broadcast %7 : vector<256x1xi32> to vector<256x128xi32>
    %20 = arith.cmpi eq, %8, %19 : vector<256x128xi32>
    %21 = arith.extui %20 : vector<256x128xi1> to vector<256x128xi32>
    %22 = arith.sitofp %21 : vector<256x128xi32> to vector<256x128xf32>
    %23 = arith.truncf %22 : vector<256x128xf32> to vector<256x128xbf16>
    %24 = arith.subf %23, %18 : vector<256x128xbf16>
    %25 = arith.addf %13, %13 : vector<256x128xbf16>
    %26 = arith.subf %25, %18 : vector<256x128xbf16>
    %27 = arith.subf %26, %23 : vector<256x128xbf16>
    %28 = tpu.concatenate %24, %27 in 0 : vector<256x128xbf16>, vector<256x128xbf16> -> vector<512x128xbf16>
    %cst = arith.constant dense<0.000000e+00> : vector<512x128xf32>
    %29 = tpu.matmul %28, %3, %cst {dimension_numbers = #tpu.dot_dimension_numbers<[1], [0], [0], [1], [0, 0, 1, 1], [], []>} : vector<512x128xbf16>, vector<128x128xbf16>, vector<512x128xf32> -> vector<512x128xf32>
    %30 = vector.extract_strided_slice %29 {offsets = [0, 0], sizes = [256, 128], strides = [1, 1]} : vector<512x128xf32> to vector<256x128xf32>
    %31 = vector.extract_strided_slice %29 {offsets = [256, 0], sizes = [256, 128], strides = [1, 1]} : vector<512x128xf32> to vector<256x128xf32>
    %32 = arith.mulf %30, %31 : vector<256x128xf32>
    %cst_4 = arith.constant dense<0.000000e+00> : vector<256xf32>
    %33 = vector.multi_reduction <add>, %32, %cst_4 [1] : vector<256x128xf32> to vector<256xf32>
    %34 = vector.shape_cast %33 : vector<256xf32> to vector<256x1xf32>
    %cst_5 = arith.constant 2.000000e-01 : f32
    %35 = vector.broadcast %cst_5 : f32 to vector<256x1xf32>
    %36 = arith.addf %34, %35 : vector<256x1xf32>
    %cst_6 = arith.constant 0.000000e+00 : f32
    %37 = vector.broadcast %cst_6 : f32 to vector<256x1xf32>
    %38 = arith.maximumf %36, %37 : vector<256x1xf32>
    %c256_i32 = arith.constant 256 : i32
    %39 = arith.muli %arg0, %c256_i32 : i32
    %40 = tpu.iota {dimensions = array<i32: 0>} : vector<256x1xi32>
    %41 = vector.broadcast %39 : i32 to vector<256x1xi32>
    %42 = arith.addi %41, %40 : vector<256x1xi32>
    %c32_i32 = arith.constant 32 : i32
    %43 = vector.broadcast %c32_i32 : i32 to vector<256x1xi32>
    %44 = arith.cmpi slt, %42, %43 : vector<256x1xi32>
    %cst_7 = arith.constant 0.000000e+00 : f32
    %45 = vector.broadcast %cst_7 : f32 to vector<256x1xf32>
    %46 = arith.select %44, %38, %45 : vector<256x1xi1>, vector<256x1xf32>
    %c0_8 = arith.constant 0 : index
    %c0_9 = arith.constant 0 : index
    %47 = vector.load %arg5[%c0_8, %c0_9] : memref<256x1xf32, #tpu.memory_space<vmem>>, vector<256x1xf32>
    %48 = arith.addf %47, %46 : vector<256x1xf32>
    %c0_10 = arith.constant 0 : index
    %c0_11 = arith.constant 0 : index
    %49 = vector.load %arg5[%c0_10, %c0_11] : memref<256x1xf32, #tpu.memory_space<vmem>>, vector<256x1xf32>
    tpu.vector_store %arg5[%c0_10, %c0_11], %48 {strides = array<i32>} : memref<256x1xf32, #tpu.memory_space<vmem>>, vector<256x1xf32>,
    %c0_i32_12 = arith.constant 0 : i32
    %50 = arith.cmpi eq, %arg0, %c0_i32_12 : i32
    %51 = arith.extui %50 : i1 to i32
    %c0_i32_13 = arith.constant 0 : i32
    %52 = arith.cmpi ne, %51, %c0_i32_13 : i32
    scf.if %52 {
      %c0_14 = arith.constant 0 : index
      %c0_15 = arith.constant 0 : index
      %53 = vector.load %arg5[%c0_14, %c0_15] : memref<256x1xf32, #tpu.memory_space<vmem>>, vector<256x1xf32>
      %cst_16 = arith.constant dense<0.000000e+00> : vector<1xf32>
      %54 = vector.multi_reduction <add>, %53, %cst_16 [0] : vector<256x1xf32> to vector<1xf32>
      %55 = vector.shape_cast %54 : vector<1xf32> to vector<1x1xf32>
      %cst_17 = arith.constant 3.125000e-02 : f32
      %56 = vector.broadcast %cst_17 : f32 to vector<1x1xf32>
      %57 = arith.mulf %55, %56 : vector<1x1xf32>
      %c0_18 = arith.constant 0 : index
      %c0_19 = arith.constant 0 : index
      %58 = vector.load %arg3[%c0_18, %c0_19] : memref<1x1xf32, #tpu.memory_space<vmem>>, vector<1x1xf32>
      tpu.vector_store %arg3[%c0_18, %c0_19], %57 {strides = array<i32>} : memref<1x1xf32, #tpu.memory_space<vmem>>, vector<1x1xf32>,
    } else {
    }
    return
  }
  func.func @transform_0(%arg0: i32) -> (i32, i32) {
    %c0_i32 = arith.constant 0 : i32
    %c0_i32_0 = arith.constant 0 : i32
    return %arg0, %c0_i32 : i32, i32
  }
  func.func @transform_2(%arg0: i32) -> (i32, i32) {
    %c0_i32 = arith.constant 0 : i32
    %c0_i32_0 = arith.constant 0 : i32
    %c0_i32_1 = arith.constant 0 : i32
    return %c0_i32, %c0_i32_0 : i32, i32
  }
}

</mosaic_0001>

<llo_original>
// kernel: tpu_custom_call.1
$region0: #{tpu_custom_call.1}
  #allocation0 [shape = 'u32[]', space=smem, size = 0x4, offset = 0x4, fixed_abs, tag = 'smem constant byte address 0x4 - core index']
  #allocation1 [shape = 'u32[144,128]{1,0:T(1,128)}', space=vmem, size = 0x12000, scoped, tag = 'internal scratch']
  #allocation2 [shape = 'bf16[128,128]{1,0:T(8,128)(2,1)}', space=vmem, size = 0x8000, scoped, tag = 'scratch operand']
  #allocation3 [shape = 'f32[256,1]{1,0:T(8,128)}', space=vmem, size = 0x20000, scoped, tag = 'scratch operand']
  #allocation4 [shape = 's32[1]{0}', space=sflag, size = 0x4, scoped, tag = 'scratch operand']
  #allocation7 [shape = 's32[]', space=sflag, size = 0x4, offset = 0, fixed_abs, tag = 'sflag constant byte address 0x0 - dummy sync flag']
  %s0 = inlined_call_operand.vmem [shape: s32[256,3], index: 0, kind: input, shape index: {}]
  %s1 = inlined_call_operand.vmem [shape: bf16[128,128], index: 1, kind: input, shape index: {}]
  %s2 = inlined_call_operand.hbm [shape: f32[1,1], index: 2, kind: output, shape index: {}]
  %s3 = sld [smem:[#allocation0]]
  $region56: #{tpu_custom_call.1} parent=0
    _
  %s5 = ssub.s32 1, %s3
  %s6 = scalar_select 0, %s5, %s3
  $region1: #{tpu_custom_call.1} parent=0
    #allocation5 [shape = 'u8[512]{0}', space=vmem, size = 0x400, scoped, tag = 'output window, operand 0, single buffered']
    #allocation6 [shape = 's32[1]{0}', space=sflag, size = 0x4, scoped, tag = 'scoped memory for tpu_custom_call.1']
    %7 = vsyncpa [#allocation6], 0
    // Predicated region
    $region2: #{tpu_custom_call.1} parent=1 // pred_check
      _
    $region3: #{tpu_custom_call.1} parent=1 // pred_check_branch
      %9 = sbr.rel (0) target = $region5
    $region4: #{tpu_custom_call.1} parent=1 // pred_region
      _
    $region5: #{tpu_custom_call.1} parent=1 // pred_fallthru
      _
    %p11 = scmp.eq.s32.totalorder 0, 0
    // Predicated region
    $region6: #{tpu_custom_call.1} parent=1 // pred_check
      %p12 = pneg %p11
    $region7: #{tpu_custom_call.1} parent=1 // pred_check_branch
      %14 = sbr.rel (%p12) target = $region9
    $region8: #{tpu_custom_call.1} parent=1 // pred_region
      %p16 = scmp.lt.u32.totalorder 64, 8
      %p17 = pneg %p16
      // Predicated region
      $region10: #{tpu_custom_call.1} parent=8 // pred_check
        _
      $region11: #{tpu_custom_call.1} parent=8 // pred_check_branch
        %19 = sbr.rel (%p16) target = $region13
      $region12: #{tpu_custom_call.1} parent=8 // pred_region
        %s35 = sand.u32 64, 7
        %p36 = scmp.eq.s32.totalorder %s35, 0
        // Predicated region
        $region25: #{tpu_custom_call.1} parent=12 // pred_check
          %p37 = pneg %p36
        $region26: #{tpu_custom_call.1} parent=12 // pred_check_branch
          %39 = sbr.rel (%p37) target = $region28
        $region27: #{tpu_custom_call.1} parent=12 // pred_region
          loop: start=0, step=1, limit=1
          $region29: #{tpu_custom_call.1} parent=27 // loop_pre_header
            _
          $region30: #{tpu_custom_call.1} parent=27 // loop_header
            %s41 = sphi 0, %s45
            %p42 = scmp.ge.s32.totalorder %s41, 1
            %s46 = sphi %s1, %s1
            %s47 = sphi [#allocation2], [#allocation2]
          $region31: #{tpu_custom_call.1} parent=27 // loop_header_branch
            %44 = sbr.rel (%p42) target = $region35
          $region32: #{tpu_custom_call.1} parent=27 // loop_body
            %v48 = vld [vmem:[%s46] sm:$0xff]
            %49 = vst [vmem:[%s47] sm:$0xff] %v48
            %v50 = vld [vmem:[%s46 + $0x8] sm:$0xff]
            %51 = vst [vmem:[%s47 + $0x8] sm:$0xff] %v50
            %v52 = vld [vmem:[%s46 + $0x10] sm:$0xff]
            %53 = vst [vmem:[%s47 + $0x10] sm:$0xff] %v52
            %v54 = vld [vmem:[%s46 + $0x18] sm:$0xff]
            %55 = vst [vmem:[%s47 + $0x18] sm:$0xff] %v54
            %v56 = vld [vmem:[%s46 + $0x20] sm:$0xff]
            %57 = vst [vmem:[%s47 + $0x20] sm:$0xff] %v56
            %v58 = vld [vmem:[%s46 + $0x28] sm:$0xff]
            %59 = vst [vmem:[%s47 + $0x28] sm:$0xff] %v58
            %v60 = vld [vmem:[%s46 + $0x30] sm:$0xff]
            %61 = vst [vmem:[%s47 + $0x30] sm:$0xff] %v60
            %v62 = vld [vmem:[%s46 + $0x38] sm:$0xff]
            %63 = vst [vmem:[%s47 + $0x38] sm:$0xff] %v62
          $region33: #{tpu_custom_call.1} parent=27 // loop_footer
            %s45 = sadd.s32 1, %s41
          $region34: #{tpu_custom_call.1} parent=27 // loop_footer_branch
            %40 = sbr.rel target = $region30
          $region35: #{tpu_custom_call.1} parent=27 // loop_exit
            _
        $region28: #{tpu_custom_call.1} parent=12 // pred_fallthru
          _
        %p64 = pneg %p36
        // Predicated region
        $region36: #{tpu_custom_call.1} parent=12 // pred_check
          _
        $region37: #{tpu_custom_call.1} parent=12 // pred_check_branch
          %66 = sbr.rel (%p36) target = $region39
        $region38: #{tpu_custom_call.1} parent=12 // pred_region
          %s67 = sand.u32 64, 7
        $region39: #{tpu_custom_call.1} parent=12 // pred_fallthru
          _
      $region13: #{tpu_custom_call.1} parent=8 // pred_fallthru
        _
      // Predicated region
      $region14: #{tpu_custom_call.1} parent=8 // pred_check
        %p20 = pneg %p16
      $region15: #{tpu_custom_call.1} parent=8 // pred_check_branch
        %22 = sbr.rel (%p20) target = $region17
      $region16: #{tpu_custom_call.1} parent=8 // pred_region
        %s23 = sshll.u32 1, 64
        %s24 = ssub.s32 %s23, 1
        loop: start=0, step=1, limit=1
        $region18: #{tpu_custom_call.1} parent=16 // loop_pre_header
          _
        $region19: #{tpu_custom_call.1} parent=16 // loop_header
          %s26 = sphi 0, %s30
          %p27 = scmp.ge.s32.totalorder %s26, 1
          %s31 = sphi %s1, %s1
          %s32 = sphi [#allocation2], [#allocation2]
        $region20: #{tpu_custom_call.1} parent=16 // loop_header_branch
          %29 = sbr.rel (%p27) target = $region24
        $region21: #{tpu_custom_call.1} parent=16 // loop_body
          %v33 = vld [vmem:[%s31] sm:%s24]
          %34 = vst [vmem:[%s32] sm:%s24] %v33
        $region22: #{tpu_custom_call.1} parent=16 // loop_footer
          %s30 = sadd.s32 1, %s26
        $region23: #{tpu_custom_call.1} parent=16 // loop_footer_branch
          %25 = sbr.rel target = $region19
        $region24: #{tpu_custom_call.1} parent=16 // loop_exit
          _
      $region17: #{tpu_custom_call.1} parent=8 // pred_fallthru
        _
      // Predicated region
      $region40: #{tpu_custom_call.1} parent=8 // pred_check
        _
      $region41: #{tpu_custom_call.1} parent=8 // pred_check_branch
        %70 = sbr.rel (0) target = $region43
      $region42: #{tpu_custom_call.1} parent=8 // pred_region
        %71 = vsyncadd [#allocation4], 1024
      $region43: #{tpu_custom_call.1} parent=8 // pred_fallthru
        _
      %s72 = smul.u32 4, 16
      %s73 = smul.u32 %s72, 1
      %s74 = sshll.u32 %s73, 4
      %75 = dma.done [#allocation4], %s74
      %vm76 = vcmask 7168
      %77 = vst.msk [vmem:[#allocation3] sm:$0xff] %vm76, 0.0
      %78 = vst.msk [vmem:[#allocation3 + $0x8] sm:$0xff] %vm76, 0.0
      %79 = vst.msk [vmem:[#allocation3 + $0x10] sm:$0xff] %vm76, 0.0
      %80 = vst.msk [vmem:[#allocation3 + $0x18] sm:$0xff] %vm76, 0.0
      %81 = vst.msk [vmem:[#allocation3 + $0x20] sm:$0xff] %vm76, 0.0
      %82 = vst.msk [vmem:[#allocation3 + $0x28] sm:$0xff] %vm76, 0.0
      %83 = vst.msk [vmem:[#allocation3 + $0x30] sm:$0xff] %vm76, 0.0
      %84 = vst.msk [vmem:[#allocation3 + $0x38] sm:$0xff] %vm76, 0.0
      %85 = vst.msk [vmem:[#allocation3 + $0x40] sm:$0xff] %vm76, 0.0
      %86 = vst.msk [vmem:[#allocation3 + $0x48] sm:$0xff] %vm76, 0.0
      %87 = vst.msk [vmem:[#allocation3 + $0x50] sm:$0xff] %vm76, 0.0
      %88 = vst.msk [vmem:[#allocation3 + $0x58] sm:$0xff] %vm76, 0.0
      %89 = vst.msk [vmem:[#allocation3 + $0x60] sm:$0xff] %vm76, 0.0
      %90 = vst.msk [vmem:[#allocation3 + $0x68] sm:$0xff] %vm76, 0.0
      %91 = vst.msk [vmem:[#allocation3 + $0x70] sm:$0xff] %vm76, 0.0
      %92 = vst.msk [vmem:[#allocation3 + $0x78] sm:$0xff] %vm76, 0.0
      %93 = vst.msk [vmem:[#allocation3 + $0x80] sm:$0xff] %vm76, 0.0
      %94 = vst.msk [vmem:[#allocation3 + $0x88] sm:$0xff] %vm76, 0.0
      %95 = vst.msk [vmem:[#allocation3 + $0x90] sm:$0xff] %vm76, 0.0
      %96 = vst.msk [vmem:[#allocation3 + $0x98] sm:$0xff] %vm76, 0.0
      %97 = vst.msk [vmem:[#allocation3 + $0xa0] sm:$0xff] %vm76, 0.0
      %98 = vst.msk [vmem:[#allocation3 + $0xa8] sm:$0xff] %vm76, 0.0
      %99 = vst.msk [vmem:[#allocation3 + $0xb0] sm:$0xff] %vm76, 0.0
      %100 = vst.msk [vmem:[#allocation3 + $0xb8] sm:$0xff] %vm76, 0.0
      %101 = vst.msk [vmem:[#allocation3 + $0xc0] sm:$0xff] %vm76, 0.0
      %102 = vst.msk [vmem:[#allocation3 + $0xc8] sm:$0xff] %vm76, 0.0
      %103 = vst.msk [vmem:[#allocation3 + $0xd0] sm:$0xff] %vm76, 0.0
      %104 = vst.msk [vmem:[#allocation3 + $0xd8] sm:$0xff] %vm76, 0.0
      %105 = vst.msk [vmem:[#allocation3 + $0xe0] sm:$0xff] %vm76, 0.0
      %106 = vst.msk [vmem:[#allocation3 + $0xe8] sm:$0xff] %vm76, 0.0
      %107 = vst.msk [vmem:[#allocation3 + $0xf0] sm:$0xff] %vm76, 0.0
      %108 = vst.msk [vmem:[#allocation3 + $0xf8] sm:$0xff] %vm76, 0.0
    $region9: #{tpu_custom_call.1} parent=1 // pred_fallthru
      _
    %v109 = vld [vmem:[#allocation2] sm:$0xf]
    %v110 = vld [vmem:[#allocation2 + $0x4] sm:$0xf]
    %v111 = vld [vmem:[#allocation2 + $0x8] sm:$0xf]
    %v112 = vld [vmem:[#allocation2 + $0xc] sm:$0xf]
    %v113 = vld [vmem:[#allocation2 + $0x10] sm:$0xf]
    %v114 = vld [vmem:[#allocation2 + $0x14] sm:$0xf]
    %v115 = vld [vmem:[#allocation2 + $0x18] sm:$0xf]
    %v116 = vld [vmem:[#allocation2 + $0x1c] sm:$0xf]
    %v117 = vld [vmem:[#allocation2 + $0x20] sm:$0xf]
    %v118 = vld [vmem:[#allocation2 + $0x24] sm:$0xf]
    %v119 = vld [vmem:[#allocation2 + $0x28] sm:$0xf]
    %v120 = vld [vmem:[#allocation2 + $0x2c] sm:$0xf]
    %v121 = vld [vmem:[#allocation2 + $0x30] sm:$0xf]
    %v122 = vld [vmem:[#allocation2 + $0x34] sm:$0xf]
    %v123 = vld [vmem:[#allocation2 + $0x38] sm:$0xf]
    %v124 = vld [vmem:[#allocation2 + $0x3c] sm:$0xf]
    %v125 = vld [vmem:[%s0] sm:$0xff]
    %v126 = vld [vmem:[%s0 + $0x8] sm:$0xff]
    %v127 = vld [vmem:[%s0 + $0x10] sm:$0xff]
    %v128 = vld [vmem:[%s0 + $0x18] sm:$0xff]
    %v129 = vld [vmem:[%s0 + $0x20] sm:$0xff]
    %v130 = vld [vmem:[%s0 + $0x28] sm:$0xff]
    %v131 = vld [vmem:[%s0 + $0x30] sm:$0xff]
    %v132 = vld [vmem:[%s0 + $0x38] sm:$0xff]
    %v133 = vld [vmem:[%s0 + $0x40] sm:$0xff]
    %v134 = vld [vmem:[%s0 + $0x48] sm:$0xff]
    %v135 = vld [vmem:[%s0 + $0x50] sm:$0xff]
    %v136 = vld [vmem:[%s0 + $0x58] sm:$0xff]
    %v137 = vld [vmem:[%s0 + $0x60] sm:$0xff]
    %v138 = vld [vmem:[%s0 + $0x68] sm:$0xff]
    %v139 = vld [vmem:[%s0 + $0x70] sm:$0xff]
    %v140 = vld [vmem:[%s0 + $0x78] sm:$0xff]
    %v141 = vld [vmem:[%s0 + $0x80] sm:$0xff]
    %v142 = vld [vmem:[%s0 + $0x88] sm:$0xff]
    %v143 = vld [vmem:[%s0 + $0x90] sm:$0xff]
    %v144 = vld [vmem:[%s0 + $0x98] sm:$0xff]
    %v145 = vld [vmem:[%s0 + $0xa0] sm:$0xff]
    %v146 = vld [vmem:[%s0 + $0xa8] sm:$0xff]
    %v147 = vld [vmem:[%s0 + $0xb0] sm:$0xff]
    %v148 = vld [vmem:[%s0 + $0xb8] sm:$0xff]
    %v149 = vld [vmem:[%s0 + $0xc0] sm:$0xff]
    %v150 = vld [vmem:[%s0 + $0xc8] sm:$0xff]
    %v151 = vld [vmem:[%s0 + $0xd0] sm:$0xff]
    %v152 = vld [vmem:[%s0 + $0xd8] sm:$0xff]
    %v153 = vld [vmem:[%s0 + $0xe0] sm:$0xff]
    %v154 = vld [vmem:[%s0 + $0xe8] sm:$0xff]
    %v155 = vld [vmem:[%s0 + $0xf0] sm:$0xff]
    %v156 = vld [vmem:[%s0 + $0xf8] sm:$0xff]
    %v157 = vlaneseq
    %v158 = vand.u32 %v157, 127
    %159 = vset.pattern.permute.xlu0 0
    %160 = vperm.xlu0 %159, %v125
    %v161 = vpop.permute.xlu0 %160
    %162 = vset.pattern.permute.xlu0 0
    %163 = vperm.xlu0 %162, %v126
    %v164 = vpop.permute.xlu0 %163
    %165 = vset.pattern.permute.xlu0 0
    %166 = vperm.xlu0 %165, %v127
    %v167 = vpop.permute.xlu0 %166
    %168 = vset.pattern.permute.xlu0 0
    %169 = vperm.xlu0 %168, %v128
    %v170 = vpop.permute.xlu0 %169
    %171 = vset.pattern.permute.xlu0 0
    %172 = vperm.xlu0 %171, %v129
    %v173 = vpop.permute.xlu0 %172
    %174 = vset.pattern.permute.xlu0 0
    %175 = vperm.xlu0 %174, %v130
    %v176 = vpop.permute.xlu0 %175
    %177 = vset.pattern.permute.xlu0 0
    %178 = vperm.xlu0 %177, %v131
    %v179 = vpop.permute.xlu0 %178
    %180 = vset.pattern.permute.xlu0 0
    %181 = vperm.xlu0 %180, %v132
    %v182 = vpop.permute.xlu0 %181
    %183 = vset.pattern.permute.xlu0 0
    %184 = vperm.xlu0 %183, %v133
    %v185 = vpop.permute.xlu0 %184
    %186 = vset.pattern.permute.xlu0 0
    %187 = vperm.xlu0 %186, %v134
    %v188 = vpop.permute.xlu0 %187
    %189 = vset.pattern.permute.xlu0 0
    %190 = vperm.xlu0 %189, %v135
    %v191 = vpop.permute.xlu0 %190
    %192 = vset.pattern.permute.xlu0 0
    %193 = vperm.xlu0 %192, %v136
    %v194 = vpop.permute.xlu0 %193
    %195 = vset.pattern.permute.xlu0 0
    %196 = vperm.xlu0 %195, %v137
    %v197 = vpop.permute.xlu0 %196
    %198 = vset.pattern.permute.xlu0 0
    %199 = vperm.xlu0 %198, %v138
    %v200 = vpop.permute.xlu0 %199
    %201 = vset.pattern.permute.xlu0 0
    %202 = vperm.xlu0 %201, %v139
    %v203 = vpop.permute.xlu0 %202
    %204 = vset.pattern.permute.xlu0 0
    %205 = vperm.xlu0 %204, %v140
    %v206 = vpop.permute.xlu0 %205
    %207 = vset.pattern.permute.xlu0 0
    %208 = vperm.xlu0 %207, %v141
    %v209 = vpop.permute.xlu0 %208
    %210 = vset.pattern.permute.xlu0 0
    %211 = vperm.xlu0 %210, %v142
    %v212 = vpop.permute.xlu0 %211
    %213 = vset.pattern.permute.xlu0 0
    %214 = vperm.xlu0 %213, %v143
    %v215 = vpop.permute.xlu0 %214
    %216 = vset.pattern.permute.xlu0 0
    %217 = vperm.xlu0 %216, %v144
    %v218 = vpop.permute.xlu0 %217
    %219 = vset.pattern.permute.xlu0 0
    %220 = vperm.xlu0 %219, %v145
    %v221 = vpop.permute.xlu0 %220
    %222 = vset.pattern.permute.xlu0 0
    %223 = vperm.xlu0 %222, %v146
    %v224 = vpop.permute.xlu0 %223
    %225 = vset.pattern.permute.xlu0 0
    %226 = vperm.xlu0 %225, %v147
    %v227 = vpop.permute.xlu0 %226
    %228 = vset.pattern.permute.xlu0 0
    %229 = vperm.xlu0 %228, %v148
    %v230 = vpop.permute.xlu0 %229
    %231 = vset.pattern.permute.xlu0 0
    %232 = vperm.xlu0 %231, %v149
    %v233 = vpop.permute.xlu0 %232
    %234 = vset.pattern.permute.xlu0 0
    %235 = vperm.xlu0 %234, %v150
    %v236 = vpop.permute.xlu0 %235
    %237 = vset.pattern.permute.xlu0 0
    %238 = vperm.xlu0 %237, %v151
    %v239 = vpop.permute.xlu0 %238
    %240 = vset.pattern.permute.xlu0 0
    %241 = vperm.xlu0 %240, %v152
    %v242 = vpop.permute.xlu0 %241
    %243 = vset.pattern.permute.xlu0 0
    %244 = vperm.xlu0 %243, %v153
    %v245 = vpop.permute.xlu0 %244
    %246 = vset.pattern.permute.xlu0 0
    %247 = vperm.xlu0 %246, %v154
    %v248 = vpop.permute.xlu0 %247
    %249 = vset.pattern.permute.xlu0 0
    %250 = vperm.xlu0 %249, %v155
    %v251 = vpop.permute.xlu0 %250
    %252 = vset.pattern.permute.xlu0 0
    %253 = vperm.xlu0 %252, %v156
    %v254 = vpop.permute.xlu0 %253
    %vm255 = vcmp.eq.s32.totalorder %v158, %v161
    %vm256 = vcmp.eq.s32.totalorder %v158, %v164
    %vm257 = vcmp.eq.s32.totalorder %v158, %v167
    %vm258 = vcmp.eq.s32.totalorder %v158, %v170
    %vm259 = vcmp.eq.s32.totalorder %v158, %v173
    %vm260 = vcmp.eq.s32.totalorder %v158, %v176
    %vm261 = vcmp.eq.s32.totalorder %v158, %v179
    %vm262 = vcmp.eq.s32.totalorder %v158, %v182
    %vm263 = vcmp.eq.s32.totalorder %v158, %v185
    %vm264 = vcmp.eq.s32.totalorder %v158, %v188
    %vm265 = vcmp.eq.s32.totalorder %v158, %v191
    %vm266 = vcmp.eq.s32.totalorder %v158, %v194
    %vm267 = vcmp.eq.s32.totalorder %v158, %v197
    %vm268 = vcmp.eq.s32.totalorder %v158, %v200
    %vm269 = vcmp.eq.s32.totalorder %v158, %v203
    %vm270 = vcmp.eq.s32.totalorder %v158, %v206
    %vm271 = vcmp.eq.s32.totalorder %v158, %v209
    %vm272 = vcmp.eq.s32.totalorder %v158, %v212
    %vm273 = vcmp.eq.s32.totalorder %v158, %v215
    %vm274 = vcmp.eq.s32.totalorder %v158, %v218
    %vm275 = vcmp.eq.s32.totalorder %v158, %v221
    %vm276 = vcmp.eq.s32.totalorder %v158, %v224
    %vm277 = vcmp.eq.s32.totalorder %v158, %v227
    %vm278 = vcmp.eq.s32.totalorder %v158, %v230
    %vm279 = vcmp.eq.s32.totalorder %v158, %v233
    %vm280 = vcmp.eq.s32.totalorder %v158, %v236
    %vm281 = vcmp.eq.s32.totalorder %v158, %v239
    %vm282 = vcmp.eq.s32.totalorder %v158, %v242
    %vm283 = vcmp.eq.s32.totalorder %v158, %v245
    %vm284 = vcmp.eq.s32.totalorder %v158, %v248
    %vm285 = vcmp.eq.s32.totalorder %v158, %v251
    %vm286 = vcmp.eq.s32.totalorder %v158, %v254
    %v287 = vsel %vm255, 1, 0
    %v288 = vsel %vm256, 1, 0
    %v289 = vsel %vm257, 1, 0
    %v290 = vsel %vm258, 1, 0
    %v291 = vsel %vm259, 1, 0
    %v292 = vsel %vm260, 1, 0
    %v293 = vsel %vm261, 1, 0
    %v294 = vsel %vm262, 1, 0
    %v295 = vsel %vm263, 1, 0
    %v296 = vsel %vm264, 1, 0
    %v297 = vsel %vm265, 1, 0
    %v298 = vsel %vm266, 1, 0
    %v299 = vsel %vm267, 1, 0
    %v300 = vsel %vm268, 1, 0
    %v301 = vsel %vm269, 1, 0
    %v302 = vsel %vm270, 1, 0
    %v303 = vsel %vm271, 1, 0
    %v304 = vsel %vm272, 1, 0
    %v305 = vsel %vm273, 1, 0
    %v306 = vsel %vm274, 1, 0
    %v307 = vsel %vm275, 1, 0
    %v308 = vsel %vm276, 1, 0
    %v309 = vsel %vm277, 1, 0
    %v310 = vsel %vm278, 1, 0
    %v311 = vsel %vm279, 1, 0
    %v312 = vsel %vm280, 1, 0
    %v313 = vsel %vm281, 1, 0
    %v314 = vsel %vm282, 1, 0
    %v315 = vsel %vm283, 1, 0
    %v316 = vsel %vm284, 1, 0
    %v317 = vsel %vm285, 1, 0
    %v318 = vsel %vm286, 1, 0
    %v319 = vcvt.s32.f32 %v287
    %v320 = vcvt.s32.f32 %v288
    %v321 = vcvt.s32.f32 %v289
    %v322 = vcvt.s32.f32 %v290
    %v323 = vcvt.s32.f32 %v291
    %v324 = vcvt.s32.f32 %v292
    %v325 = vcvt.s32.f32 %v293
    %v326 = vcvt.s32.f32 %v294
    %v327 = vcvt.s32.f32 %v295
    %v328 = vcvt.s32.f32 %v296
    %v329 = vcvt.s32.f32 %v297
    %v330 = vcvt.s32.f32 %v298
    %v331 = vcvt.s32.f32 %v299
    %v332 = vcvt.s32.f32 %v300
    %v333 = vcvt.s32.f32 %v301
    %v334 = vcvt.s32.f32 %v302
    %v335 = vcvt.s32.f32 %v303
    %v336 = vcvt.s32.f32 %v304
    %v337 = vcvt.s32.f32 %v305
    %v338 = vcvt.s32.f32 %v306
    %v339 = vcvt.s32.f32 %v307
    %v340 = vcvt.s32.f32 %v308
    %v341 = vcvt.s32.f32 %v309
    %v342 = vcvt.s32.f32 %v310
    %v343 = vcvt.s32.f32 %v311
    %v344 = vcvt.s32.f32 %v312
    %v345 = vcvt.s32.f32 %v313
    %v346 = vcvt.s32.f32 %v314
    %v347 = vcvt.s32.f32 %v315
    %v348 = vcvt.s32.f32 %v316
    %v349 = vcvt.s32.f32 %v317
    %v350 = vcvt.s32.f32 %v318
    %v351 = vpack.c.bf16 %v320, %v319
    %v352 = vpack.c.bf16 %v322, %v321
    %v353 = vpack.c.bf16 %v324, %v323
    %v354 = vpack.c.bf16 %v326, %v325
    %v355 = vpack.c.bf16 %v328, %v327
    %v356 = vpack.c.bf16 %v330, %v329
    %v357 = vpack.c.bf16 %v332, %v331
    %v358 = vpack.c.bf16 %v334, %v333
    %v359 = vpack.c.bf16 %v336, %v335
    %v360 = vpack.c.bf16 %v338, %v337
    %v361 = vpack.c.bf16 %v340, %v339
    %v362 = vpack.c.bf16 %v342, %v341
    %v363 = vpack.c.bf16 %v344, %v343
    %v364 = vpack.c.bf16 %v346, %v345
    %v365 = vpack.c.bf16 %v348, %v347
    %v366 = vpack.c.bf16 %v350, %v349
    %367 = vset.pattern.permute.xlu0 1
    %368 = vperm.xlu0 %367, %v125
    %v369 = vpop.permute.xlu0 %368
    %370 = vset.pattern.permute.xlu0 1
    %371 = vperm.xlu0 %370, %v126
    %v372 = vpop.permute.xlu0 %371
    %373 = vset.pattern.permute.xlu0 1
    %374 = vperm.xlu0 %373, %v127
    %v375 = vpop.permute.xlu0 %374
    %376 = vset.pattern.permute.xlu0 1
    %377 = vperm.xlu0 %376, %v128
    %v378 = vpop.permute.xlu0 %377
    %379 = vset.pattern.permute.xlu0 1
    %380 = vperm.xlu0 %379, %v129
    %v381 = vpop.permute.xlu0 %380
    %382 = vset.pattern.permute.xlu0 1
    %383 = vperm.xlu0 %382, %v130
    %v384 = vpop.permute.xlu0 %383
    %385 = vset.pattern.permute.xlu0 1
    %386 = vperm.xlu0 %385, %v131
    %v387 = vpop.permute.xlu0 %386
    %388 = vset.pattern.permute.xlu0 1
    %389 = vperm.xlu0 %388, %v132
    %v390 = vpop.permute.xlu0 %389
    %391 = vset.pattern.permute.xlu0 1
    %392 = vperm.xlu0 %391, %v133
    %v393 = vpop.permute.xlu0 %392
    %394 = vset.pattern.permute.xlu0 1
    %395 = vperm.xlu0 %394, %v134
    %v396 = vpop.permute.xlu0 %395
    %397 = vset.pattern.permute.xlu0 1
    %398 = vperm.xlu0 %397, %v135
    %v399 = vpop.permute.xlu0 %398
    %400 = vset.pattern.permute.xlu0 1
    %401 = vperm.xlu0 %400, %v136
    %v402 = vpop.permute.xlu0 %401
    %403 = vset.pattern.permute.xlu0 1
    %404 = vperm.xlu0 %403, %v137
    %v405 = vpop.permute.xlu0 %404
    %406 = vset.pattern.permute.xlu0 1
    %407 = vperm.xlu0 %406, %v138
    %v408 = vpop.permute.xlu0 %407
    %409 = vset.pattern.permute.xlu0 1
    %410 = vperm.xlu0 %409, %v139
    %v411 = vpop.permute.xlu0 %410
    %412 = vset.pattern.permute.xlu0 1
    %413 = vperm.xlu0 %412, %v140
    %v414 = vpop.permute.xlu0 %413
    %415 = vset.pattern.permute.xlu0 1
    %416 = vperm.xlu0 %415, %v141
    %v417 = vpop.permute.xlu0 %416
    %418 = vset.pattern.permute.xlu0 1
    %419 = vperm.xlu0 %418, %v142
    %v420 = vpop.permute.xlu0 %419
    %421 = vset.pattern.permute.xlu0 1
    %422 = vperm.xlu0 %421, %v143
    %v423 = vpop.permute.xlu0 %422
    %424 = vset.pattern.permute.xlu0 1
    %425 = vperm.xlu0 %424, %v144
    %v426 = vpop.permute.xlu0 %425
    %427 = vset.pattern.permute.xlu0 1
    %428 = vperm.xlu0 %427, %v145
    %v429 = vpop.permute.xlu0 %428
    %430 = vset.pattern.permute.xlu0 1
    %431 = vperm.xlu0 %430, %v146
    %v432 = vpop.permute.xlu0 %431
    %433 = vset.pattern.permute.xlu0 1
    %434 = vperm.xlu0 %433, %v147
    %v435 = vpop.permute.xlu0 %434
    %436 = vset.pattern.permute.xlu0 1
    %437 = vperm.xlu0 %436, %v148
    %v438 = vpop.permute.xlu0 %437
    %439 = vset.pattern.permute.xlu0 1
    %440 = vperm.xlu0 %439, %v149
    %v441 = vpop.permute.xlu0 %440
    %442 = vset.pattern.permute.xlu0 1
    %443 = vperm.xlu0 %442, %v150
    %v444 = vpop.permute.xlu0 %443
    %445 = vset.pattern.permute.xlu0 1
    %446 = vperm.xlu0 %445, %v151
    %v447 = vpop.permute.xlu0 %446
    %448 = vset.pattern.permute.xlu0 1
    %449 = vperm.xlu0 %448, %v152
    %v450 = vpop.permute.xlu0 %449
    %451 = vset.pattern.permute.xlu0 1
    %452 = vperm.xlu0 %451, %v153
    %v453 = vpop.permute.xlu0 %452
    %454 = vset.pattern.permute.xlu0 1
    %455 = vperm.xlu0 %454, %v154
    %v456 = vpop.permute.xlu0 %455
    %457 = vset.pattern.permute.xlu0 1
    %458 = vperm.xlu0 %457, %v155
    %v459 = vpop.permute.xlu0 %458
    %460 = vset.pattern.permute.xlu0 1
    %461 = vperm.xlu0 %460, %v156
    %v462 = vpop.permute.xlu0 %461
    %vm463 = vcmp.eq.s32.totalorder %v158, %v369
    %vm464 = vcmp.eq.s32.totalorder %v158, %v372
    %vm465 = vcmp.eq.s32.totalorder %v158, %v375
    %vm466 = vcmp.eq.s32.totalorder %v158, %v378
    %vm467 = vcmp.eq.s32.totalorder %v158, %v381
    %vm468 = vcmp.eq.s32.totalorder %v158, %v384
    %vm469 = vcmp.eq.s32.totalorder %v158, %v387
    %vm470 = vcmp.eq.s32.totalorder %v158, %v390
    %vm471 = vcmp.eq.s32.totalorder %v158, %v393
    %vm472 = vcmp.eq.s32.totalorder %v158, %v396
    %vm473 = vcmp.eq.s32.totalorder %v158, %v399
    %vm474 = vcmp.eq.s32.totalorder %v158, %v402
    %vm475 = vcmp.eq.s32.totalorder %v158, %v405
    %vm476 = vcmp.eq.s32.totalorder %v158, %v408
    %vm477 = vcmp.eq.s32.totalorder %v158, %v411
    %vm478 = vcmp.eq.s32.totalorder %v158, %v414
    %vm479 = vcmp.eq.s32.totalorder %v158, %v417
    %vm480 = vcmp.eq.s32.totalorder %v158, %v420
    %vm481 = vcmp.eq.s32.totalorder %v158, %v423
    %vm482 = vcmp.eq.s32.totalorder %v158, %v426
    %vm483 = vcmp.eq.s32.totalorder %v158, %v429
    %vm484 = vcmp.eq.s32.totalorder %v158, %v432
    %vm485 = vcmp.eq.s32.totalorder %v158, %v435
    %vm486 = vcmp.eq.s32.totalorder %v158, %v438
    %vm487 = vcmp.eq.s32.totalorder %v158, %v441
    %vm488 = vcmp.eq.s32.totalorder %v158, %v444
    %vm489 = vcmp.eq.s32.totalorder %v158, %v447
    %vm490 = vcmp.eq.s32.totalorder %v158, %v450
    %vm491 = vcmp.eq.s32.totalorder %v158, %v453
    %vm492 = vcmp.eq.s32.totalorder %v158, %v456
    %vm493 = vcmp.eq.s32.totalorder %v158, %v459
    %vm494 = vcmp.eq.s32.totalorder %v158, %v462
    %v495 = vsel %vm463, 1, 0
    %v496 = vsel %vm464, 1, 0
    %v497 = vsel %vm465, 1, 0
    %v498 = vsel %vm466, 1, 0
    %v499 = vsel %vm467, 1, 0
    %v500 = vsel %vm468, 1, 0
    %v501 = vsel %vm469, 1, 0
    %v502 = vsel %vm470, 1, 0
    %v503 = vsel %vm471, 1, 0
    %v504 = vsel %vm472, 1, 0
    %v505 = vsel %vm473, 1, 0
    %v506 = vsel %vm474, 1, 0
    %v507 = vsel %vm475, 1, 0
    %v508 = vsel %vm476, 1, 0
    %v509 = vsel %vm477, 1, 0
    %v510 = vsel %vm478, 1, 0
    %v511 = vsel %vm479, 1, 0
    %v512 = vsel %vm480, 1, 0
    %v513 = vsel %vm481, 1, 0
    %v514 = vsel %vm482, 1, 0
    %v515 = vsel %vm483, 1, 0
    %v516 = vsel %vm484, 1, 0
    %v517 = vsel %vm485, 1, 0
    %v518 = vsel %vm486, 1, 0
    %v519 = vsel %vm487, 1, 0
    %v520 = vsel %vm488, 1, 0
    %v521 = vsel %vm489, 1, 0
    %v522 = vsel %vm490, 1, 0
    %v523 = vsel %vm491, 1, 0
    %v524 = vsel %vm492, 1, 0
    %v525 = vsel %vm493, 1, 0
    %v526 = vsel %vm494, 1, 0
    %v527 = vcvt.s32.f32 %v495
    %v528 = vcvt.s32.f32 %v496
    %v529 = vcvt.s32.f32 %v497
    %v530 = vcvt.s32.f32 %v498
    %v531 = vcvt.s32.f32 %v499
    %v532 = vcvt.s32.f32 %v500
    %v533 = vcvt.s32.f32 %v501
    %v534 = vcvt.s32.f32 %v502
    %v535 = vcvt.s32.f32 %v503
    %v536 = vcvt.s32.f32 %v504
    %v537 = vcvt.s32.f32 %v505
    %v538 = vcvt.s32.f32 %v506
    %v539 = vcvt.s32.f32 %v507
    %v540 = vcvt.s32.f32 %v508
    %v541 = vcvt.s32.f32 %v509
    %v542 = vcvt.s32.f32 %v510
    %v543 = vcvt.s32.f32 %v511
    %v544 = vcvt.s32.f32 %v512
    %v545 = vcvt.s32.f32 %v513
    %v546 = vcvt.s32.f32 %v514
    %v547 = vcvt.s32.f32 %v515
    %v548 = vcvt.s32.f32 %v516
    %v549 = vcvt.s32.f32 %v517
    %v550 = vcvt.s32.f32 %v518
    %v551 = vcvt.s32.f32 %v519
    %v552 = vcvt.s32.f32 %v520
    %v553 = vcvt.s32.f32 %v521
    %v554 = vcvt.s32.f32 %v522
    %v555 = vcvt.s32.f32 %v523
    %v556 = vcvt.s32.f32 %v524
    %v557 = vcvt.s32.f32 %v525
    %v558 = vcvt.s32.f32 %v526
    %v559 = vpack.c.bf16 %v528, %v527
    %v560 = vpack.c.bf16 %v530, %v529
    %v561 = vpack.c.bf16 %v532, %v531
    %v562 = vpack.c.bf16 %v534, %v533
    %v563 = vpack.c.bf16 %v536, %v535
    %v564 = vpack.c.bf16 %v538, %v537
    %v565 = vpack.c.bf16 %v540, %v539
    %v566 = vpack.c.bf16 %v542, %v541
    %v567 = vpack.c.bf16 %v544, %v543
    %v568 = vpack.c.bf16 %v546, %v545
    %v569 = vpack.c.bf16 %v548, %v547
    %v570 = vpack.c.bf16 %v550, %v549
    %v571 = vpack.c.bf16 %v552, %v551
    %v572 = vpack.c.bf16 %v554, %v553
    %v573 = vpack.c.bf16 %v556, %v555
    %v574 = vpack.c.bf16 %v558, %v557
    %575 = vset.pattern.permute.xlu0 2
    %576 = vperm.xlu0 %575, %v125
    %v577 = vpop.permute.xlu0 %576
    %578 = vset.pattern.permute.xlu0 2
    %579 = vperm.xlu0 %578, %v126
    %v580 = vpop.permute.xlu0 %579
    %581 = vset.pattern.permute.xlu0 2
    %582 = vperm.xlu0 %581, %v127
    %v583 = vpop.permute.xlu0 %582
    %584 = vset.pattern.permute.xlu0 2
    %585 = vperm.xlu0 %584, %v128
    %v586 = vpop.permute.xlu0 %585
    %587 = vset.pattern.permute.xlu0 2
    %588 = vperm.xlu0 %587, %v129
    %v589 = vpop.permute.xlu0 %588
    %590 = vset.pattern.permute.xlu0 2
    %591 = vperm.xlu0 %590, %v130
    %v592 = vpop.permute.xlu0 %591
    %593 = vset.pattern.permute.xlu0 2
    %594 = vperm.xlu0 %593, %v131
    %v595 = vpop.permute.xlu0 %594
    %596 = vset.pattern.permute.xlu0 2
    %597 = vperm.xlu0 %596, %v132
    %v598 = vpop.permute.xlu0 %597
    %599 = vset.pattern.permute.xlu0 2
    %600 = vperm.xlu0 %599, %v133
    %v601 = vpop.permute.xlu0 %600
    %602 = vset.pattern.permute.xlu0 2
    %603 = vperm.xlu0 %602, %v134
    %v604 = vpop.permute.xlu0 %603
    %605 = vset.pattern.permute.xlu0 2
    %606 = vperm.xlu0 %605, %v135
    %v607 = vpop.permute.xlu0 %606
    %608 = vset.pattern.permute.xlu0 2
    %609 = vperm.xlu0 %608, %v136
    %v610 = vpop.permute.xlu0 %609
    %611 = vset.pattern.permute.xlu0 2
    %612 = vperm.xlu0 %611, %v137
    %v613 = vpop.permute.xlu0 %612
    %614 = vset.pattern.permute.xlu0 2
    %615 = vperm.xlu0 %614, %v138
    %v616 = vpop.permute.xlu0 %615
    %617 = vset.pattern.permute.xlu0 2
    %618 = vperm.xlu0 %617, %v139
    %v619 = vpop.permute.xlu0 %618
    %620 = vset.pattern.permute.xlu0 2
    %621 = vperm.xlu0 %620, %v140
    %v622 = vpop.permute.xlu0 %621
    %623 = vset.pattern.permute.xlu0 2
    %624 = vperm.xlu0 %623, %v141
    %v625 = vpop.permute.xlu0 %624
    %626 = vset.pattern.permute.xlu0 2
    %627 = vperm.xlu0 %626, %v142
    %v628 = vpop.permute.xlu0 %627
    %629 = vset.pattern.permute.xlu0 2
    %630 = vperm.xlu0 %629, %v143
    %v631 = vpop.permute.xlu0 %630
    %632 = vset.pattern.permute.xlu0 2
    %633 = vperm.xlu0 %632, %v144
    %v634 = vpop.permute.xlu0 %633
    %635 = vset.pattern.permute.xlu0 2
    %636 = vperm.xlu0 %635, %v145
    %v637 = vpop.permute.xlu0 %636
    %638 = vset.pattern.permute.xlu0 2
    %639 = vperm.xlu0 %638, %v146
    %v640 = vpop.permute.xlu0 %639
    %641 = vset.pattern.permute.xlu0 2
    %642 = vperm.xlu0 %641, %v147
    %v643 = vpop.permute.xlu0 %642
    %644 = vset.pattern.permute.xlu0 2
    %645 = vperm.xlu0 %644, %v148
    %v646 = vpop.permute.xlu0 %645
    %647 = vset.pattern.permute.xlu0 2
    %648 = vperm.xlu0 %647, %v149
    %v649 = vpop.permute.xlu0 %648
    %650 = vset.pattern.permute.xlu0 2
    %651 = vperm.xlu0 %650, %v150
    %v652 = vpop.permute.xlu0 %651
    %653 = vset.pattern.permute.xlu0 2
    %654 = vperm.xlu0 %653, %v151
    %v655 = vpop.permute.xlu0 %654
    %656 = vset.pattern.permute.xlu0 2
    %657 = vperm.xlu0 %656, %v152
    %v658 = vpop.permute.xlu0 %657
    %659 = vset.pattern.permute.xlu0 2
    %660 = vperm.xlu0 %659, %v153
    %v661 = vpop.permute.xlu0 %660
    %662 = vset.pattern.permute.xlu0 2
    %663 = vperm.xlu0 %662, %v154
    %v664 = vpop.permute.xlu0 %663
    %665 = vset.pattern.permute.xlu0 2
    %666 = vperm.xlu0 %665, %v155
    %v667 = vpop.permute.xlu0 %666
    %668 = vset.pattern.permute.xlu0 2
    %669 = vperm.xlu0 %668, %v156
    %v670 = vpop.permute.xlu0 %669
    %vm671 = vcmp.eq.s32.totalorder %v158, %v577
    %vm672 = vcmp.eq.s32.totalorder %v158, %v580
    %vm673 = vcmp.eq.s32.totalorder %v158, %v583
    %vm674 = vcmp.eq.s32.totalorder %v158, %v586
    %vm675 = vcmp.eq.s32.totalorder %v158, %v589
    %vm676 = vcmp.eq.s32.totalorder %v158, %v592
    %vm677 = vcmp.eq.s32.totalorder %v158, %v595
    %vm678 = vcmp.eq.s32.totalorder %v158, %v598
    %vm679 = vcmp.eq.s32.totalorder %v158, %v601
    %vm680 = vcmp.eq.s32.totalorder %v158, %v604
    %vm681 = vcmp.eq.s32.totalorder %v158, %v607
    %vm682 = vcmp.eq.s32.totalorder %v158, %v610
    %vm683 = vcmp.eq.s32.totalorder %v158, %v613
    %vm684 = vcmp.eq.s32.totalorder %v158, %v616
    %vm685 = vcmp.eq.s32.totalorder %v158, %v619
    %vm686 = vcmp.eq.s32.totalorder %v158, %v622
    %vm687 = vcmp.eq.s32.totalorder %v158, %v625
    %vm688 = vcmp.eq.s32.totalorder %v158, %v628
    %vm689 = vcmp.eq.s32.totalorder %v158, %v631
    %vm690 = vcmp.eq.s32.totalorder %v158, %v634
    %vm691 = vcmp.eq.s32.totalorder %v158, %v637
    %vm692 = vcmp.eq.s32.totalorder %v158, %v640
    %vm693 = vcmp.eq.s32.totalorder %v158, %v643
    %vm694 = vcmp.eq.s32.totalorder %v158, %v646
    %vm695 = vcmp.eq.s32.totalorder %v158, %v649
    %vm696 = vcmp.eq.s32.totalorder %v158, %v652
    %vm697 = vcmp.eq.s32.totalorder %v158, %v655
    %vm698 = vcmp.eq.s32.totalorder %v158, %v658
    %vm699 = vcmp.eq.s32.totalorder %v158, %v661
    %vm700 = vcmp.eq.s32.totalorder %v158, %v664
    %vm701 = vcmp.eq.s32.totalorder %v158, %v667
    %vm702 = vcmp.eq.s32.totalorder %v158, %v670
    %v703 = vsel %vm671, 1, 0
    %v704 = vsel %vm672, 1, 0
    %v705 = vsel %vm673, 1, 0
    %v706 = vsel %vm674, 1, 0
    %v707 = vsel %vm675, 1, 0
    %v708 = vsel %vm676, 1, 0
    %v709 = vsel %vm677, 1, 0
    %v710 = vsel %vm678, 1, 0
    %v711 = vsel %vm679, 1, 0
    %v712 = vsel %vm680, 1, 0
    %v713 = vsel %vm681, 1, 0
    %v714 = vsel %vm682, 1, 0
    %v715 = vsel %vm683, 1, 0
    %v716 = vsel %vm684, 1, 0
    %v717 = vsel %vm685, 1, 0
    %v718 = vsel %vm686, 1, 0
    %v719 = vsel %vm687, 1, 0
    %v720 = vsel %vm688, 1, 0
    %v721 = vsel %vm689, 1, 0
    %v722 = vsel %vm690, 1, 0
    %v723 = vsel %vm691, 1, 0
    %v724 = vsel %vm692, 1, 0
    %v725 = vsel %vm693, 1, 0
    %v726 = vsel %vm694, 1, 0
    %v727 = vsel %vm695, 1, 0
    %v728 = vsel %vm696, 1, 0
    %v729 = vsel %vm697, 1, 0
    %v730 = vsel %vm698, 1, 0
    %v731 = vsel %vm699, 1, 0
    %v732 = vsel %vm700, 1, 0
    %v733 = vsel %vm701, 1, 0
    %v734 = vsel %vm702, 1, 0
    %v735 = vcvt.s32.f32 %v703
    %v736 = vcvt.s32.f32 %v704
    %v737 = vcvt.s32.f32 %v705
    %v738 = vcvt.s32.f32 %v706
    %v739 = vcvt.s32.f32 %v707
    %v740 = vcvt.s32.f32 %v708
    %v741 = vcvt.s32.f32 %v709
    %v742 = vcvt.s32.f32 %v710
    %v743 = vcvt.s32.f32 %v711
    %v744 = vcvt.s32.f32 %v712
    %v745 = vcvt.s32.f32 %v713
    %v746 = vcvt.s32.f32 %v714
    %v747 = vcvt.s32.f32 %v715
    %v748 = vcvt.s32.f32 %v716
    %v749 = vcvt.s32.f32 %v717
    %v750 = vcvt.s32.f32 %v718
    %v751 = vcvt.s32.f32 %v719
    %v752 = vcvt.s32.f32 %v720
    %v753 = vcvt.s32.f32 %v721
    %v754 = vcvt.s32.f32 %v722
    %v755 = vcvt.s32.f32 %v723
    %v756 = vcvt.s32.f32 %v724
    %v757 = vcvt.s32.f32 %v725
    %v758 = vcvt.s32.f32 %v726
    %v759 = vcvt.s32.f32 %v727
    %v760 = vcvt.s32.f32 %v728
    %v761 = vcvt.s32.f32 %v729
    %v762 = vcvt.s32.f32 %v730
    %v763 = vcvt.s32.f32 %v731
    %v764 = vcvt.s32.f32 %v732
    %v765 = vcvt.s32.f32 %v733
    %v766 = vcvt.s32.f32 %v734
    %v767 = vpack.c.bf16 %v736, %v735
    %v768 = vpack.c.bf16 %v738, %v737
    %v769 = vpack.c.bf16 %v740, %v739
    %v770 = vpack.c.bf16 %v742, %v741
    %v771 = vpack.c.bf16 %v744, %v743
    %v772 = vpack.c.bf16 %v746, %v745
    %v773 = vpack.c.bf16 %v748, %v747
    %v774 = vpack.c.bf16 %v750, %v749
    %v775 = vpack.c.bf16 %v752, %v751
    %v776 = vpack.c.bf16 %v754, %v753
    %v777 = vpack.c.bf16 %v756, %v755
    %v778 = vpack.c.bf16 %v758, %v757
    %v779 = vpack.c.bf16 %v760, %v759
    %v780 = vpack.c.bf16 %v762, %v761
    %v781 = vpack.c.bf16 %v764, %v763
    %v782 = vpack.c.bf16 %v766, %v765
    %v783 = vsub.bf16 %v767, %v559
    %v784 = vsub.bf16 %v768, %v560
    %v785 = vsub.bf16 %v769, %v561
    %v786 = vsub.bf16 %v770, %v562
    %v787 = vsub.bf16 %v771, %v563
    %v788 = vsub.bf16 %v772, %v564
    %v789 = vsub.bf16 %v773, %v565
    %v790 = vsub.bf16 %v774, %v566
    %v791 = vsub.bf16 %v775, %v567
    %v792 = vsub.bf16 %v776, %v568
    %v793 = vsub.bf16 %v777, %v569
    %v794 = vsub.bf16 %v778, %v570
    %v795 = vsub.bf16 %v779, %v571
    %v796 = vsub.bf16 %v780, %v572
    %v797 = vsub.bf16 %v781, %v573
    %v798 = vsub.bf16 %v782, %v574
    %v799 = vadd.bf16 %v351, %v351
    %v800 = vadd.bf16 %v352, %v352
    %v801 = vadd.bf16 %v353, %v353
    %v802 = vadd.bf16 %v354, %v354
    %v803 = vadd.bf16 %v355, %v355
    %v804 = vadd.bf16 %v356, %v356
    %v805 = vadd.bf16 %v357, %v357
    %v806 = vadd.bf16 %v358, %v358
    %v807 = vadd.bf16 %v359, %v359
    %v808 = vadd.bf16 %v360, %v360
    %v809 = vadd.bf16 %v361, %v361
    %v810 = vadd.bf16 %v362, %v362
    %v811 = vadd.bf16 %v363, %v363
    %v812 = vadd.bf16 %v364, %v364
    %v813 = vadd.bf16 %v365, %v365
    %v814 = vadd.bf16 %v366, %v366
    %v815 = vsub.bf16 %v799, %v559
    %v816 = vsub.bf16 %v800, %v560
    %v817 = vsub.bf16 %v801, %v561
    %v818 = vsub.bf16 %v802, %v562
    %v819 = vsub.bf16 %v803, %v563
    %v820 = vsub.bf16 %v804, %v564
    %v821 = vsub.bf16 %v805, %v565
    %v822 = vsub.bf16 %v806, %v566
    %v823 = vsub.bf16 %v807, %v567
    %v824 = vsub.bf16 %v808, %v568
    %v825 = vsub.bf16 %v809, %v569
    %v826 = vsub.bf16 %v810, %v570
    %v827 = vsub.bf16 %v811, %v571
    %v828 = vsub.bf16 %v812, %v572
    %v829 = vsub.bf16 %v813, %v573
    %v830 = vsub.bf16 %v814, %v574
    %v831 = vsub.bf16 %v815, %v767
    %v832 = vsub.bf16 %v816, %v768
    %v833 = vsub.bf16 %v817, %v769
    %v834 = vsub.bf16 %v818, %v770
    %v835 = vsub.bf16 %v819, %v771
    %v836 = vsub.bf16 %v820, %v772
    %v837 = vsub.bf16 %v821, %v773
    %v838 = vsub.bf16 %v822, %v774
    %v839 = vsub.bf16 %v823, %v775
    %v840 = vsub.bf16 %v824, %v776
    %v841 = vsub.bf16 %v825, %v777
    %v842 = vsub.bf16 %v826, %v778
    %v843 = vsub.bf16 %v827, %v779
    %v844 = vsub.bf16 %v828, %v780
    %v845 = vsub.bf16 %v829, %v781
    %v846 = vsub.bf16 %v830, %v782
    %v863 = vunpack.c.l.b16 %v109
    %v864 = vunpack.c.l.b16 %v110
    %v865 = vunpack.c.l.b16 %v111
    %v866 = vunpack.c.l.b16 %v112
    %v867 = vunpack.c.l.b16 %v113
    %v868 = vunpack.c.l.b16 %v114
    %v869 = vunpack.c.l.b16 %v115
    %v870 = vunpack.c.l.b16 %v116
    %v871 = vunpack.c.l.b16 %v117
    %v872 = vunpack.c.l.b16 %v118
    %v873 = vunpack.c.l.b16 %v119
    %v874 = vunpack.c.l.b16 %v120
    %v875 = vunpack.c.l.b16 %v121
    %v876 = vunpack.c.l.b16 %v122
    %v877 = vunpack.c.l.b16 %v123
    %v878 = vunpack.c.l.b16 %v124
    %v879 = vpack.c.b16 %v864, %v863
    %v880 = vpack.c.b16 %v866, %v865
    %v881 = vpack.c.b16 %v868, %v867
    %v882 = vpack.c.b16 %v870, %v869
    %v883 = vpack.c.b16 %v872, %v871
    %v884 = vpack.c.b16 %v874, %v873
    %v885 = vpack.c.b16 %v876, %v875
    %v886 = vpack.c.b16 %v878, %v877
    %895 = vmatprep.subr.bf16.mxu0 0
    %896 = vmatpush1.bf16.msra.mxu0 %v886
    %897 = vmatprep.subr.bf16.mxu0 0
    %898 = vmatpush1.bf16.msra.mxu0 %v885
    %899 = vmatprep.subr.bf16.mxu0 0
    %900 = vmatpush1.bf16.msra.mxu0 %v884
    %901 = vmatprep.subr.bf16.mxu0 0
    %902 = vmatpush1.bf16.msra.mxu0 %v883
    %903 = vmatprep.subr.bf16.mxu0 0
    %904 = vmatpush1.bf16.msra.mxu0 %v882
    %905 = vmatprep.subr.bf16.mxu0 0
    %906 = vmatpush1.bf16.msra.mxu0 %v881
    %907 = vmatprep.subr.bf16.mxu0 0
    %908 = vmatpush1.bf16.msra.mxu0 %v880
    %909 = vmatprep.subr.bf16.mxu0 0
    %910 = vmatpush1.bf16.msra.mxu0 %v879
    %911 = vmatprep.subr.bf16.mxu0 0
    %912 = vmatpush2.bf16.msra.mxu0 0
    %913 = vmatprep.subr.bf16.mxu0 0
    %914 = vmatpush2.bf16.msra.mxu0 0
    %915 = vmatprep.subr.bf16.mxu0 0
    %916 = vmatpush2.bf16.msra.mxu0 0
    %917 = vmatprep.subr.bf16.mxu0 0
    %918 = vmatpush2.bf16.msra.mxu0 0
    %919 = vmatprep.subr.bf16.mxu0 0
    %920 = vmatpush2.bf16.msra.mxu0 0
    %921 = vmatprep.subr.bf16.mxu0 0
    %922 = vmatpush2.bf16.msra.mxu0 0
    %923 = vmatprep.subr.bf16.mxu0 0
    %924 = vmatpush2.bf16.msra.mxu0 0
    %925 = vmatprep.subr.bf16.mxu0 0
    %926 = vmatpush2.bf16.msra.mxu0 0
    %927 = vmatprep.mubr.bf16.mxu0 0
    %928 = vmatmul.mubr.bf16.gmra.mxu0 %v783
    %v929 = vpop.f32.mrf.mxu0
    %v930 = vadd.f32 0.0, %v929
    %v931 = vpop.f32.mrf.mxu0
    %v932 = vpop.f32.mrf.mxu0
    %v933 = vadd.f32 0.0, %v932
    %v934 = vpop.f32.mrf.mxu0
    %935 = vmatprep.mubr.bf16.mxu0 0
    %936 = vmatmul.mubr.bf16.gmra.mxu0 %v784
    %v937 = vpop.f32.mrf.mxu0
    %v938 = vadd.f32 0.0, %v937
    %v939 = vpop.f32.mrf.mxu0
    %v940 = vpop.f32.mrf.mxu0
    %v941 = vadd.f32 0.0, %v940
    %v942 = vpop.f32.mrf.mxu0
    %943 = vmatprep.mubr.bf16.mxu0 0
    %944 = vmatmul.mubr.bf16.gmra.mxu0 %v785
    %v945 = vpop.f32.mrf.mxu0
    %v946 = vadd.f32 0.0, %v945
    %v947 = vpop.f32.mrf.mxu0
    %v948 = vpop.f32.mrf.mxu0
    %v949 = vadd.f32 0.0, %v948
    %v950 = vpop.f32.mrf.mxu0
    %951 = vmatprep.mubr.bf16.mxu0 0
    %952 = vmatmul.mubr.bf16.gmra.mxu0 %v786
    %v953 = vpop.f32.mrf.mxu0
    %v954 = vadd.f32 0.0, %v953
    %v955 = vpop.f32.mrf.mxu0
    %v956 = vpop.f32.mrf.mxu0
    %v957 = vadd.f32 0.0, %v956
    %v958 = vpop.f32.mrf.mxu0
    %959 = vmatprep.mubr.bf16.mxu0 0
    %960 = vmatmul.mubr.bf16.gmra.mxu0 %v787
    %v961 = vpop.f32.mrf.mxu0
    %v962 = vadd.f32 0.0, %v961
    %v963 = vpop.f32.mrf.mxu0
    %v964 = vpop.f32.mrf.mxu0
    %v965 = vadd.f32 0.0, %v964
    %v966 = vpop.f32.mrf.mxu0
    %967 = vmatprep.mubr.bf16.mxu0 0
    %968 = vmatmul.mubr.bf16.gmra.mxu0 %v788
    %v969 = vpop.f32.mrf.mxu0
    %v970 = vadd.f32 0.0, %v969
    %v971 = vpop.f32.mrf.mxu0
    %v972 = vpop.f32.mrf.mxu0
    %v973 = vadd.f32 0.0, %v972
    %v974 = vpop.f32.mrf.mxu0
    %975 = vmatprep.mubr.bf16.mxu0 0
    %976 = vmatmul.mubr.bf16.gmra.mxu0 %v789
    %v977 = vpop.f32.mrf.mxu0
    %v978 = vadd.f32 0.0, %v977
    %v979 = vpop.f32.mrf.mxu0
    %v980 = vpop.f32.mrf.mxu0
    %v981 = vadd.f32 0.0, %v980
    %v982 = vpop.f32.mrf.mxu0
    %983 = vmatprep.mubr.bf16.mxu0 0
    %984 = vmatmul.mubr.bf16.gmra.mxu0 %v790
    %v985 = vpop.f32.mrf.mxu0
    %v986 = vadd.f32 0.0, %v985
    %v987 = vpop.f32.mrf.mxu0
    %v988 = vpop.f32.mrf.mxu0
    %v989 = vadd.f32 0.0, %v988
    %v990 = vpop.f32.mrf.mxu0
    %991 = vmatprep.mubr.bf16.mxu0 0
    %992 = vmatmul.mubr.bf16.gmra.mxu0 %v791
    %v993 = vpop.f32.mrf.mxu0
    %v994 = vadd.f32 0.0, %v993
    %v995 = vpop.f32.mrf.mxu0
    %v996 = vpop.f32.mrf.mxu0
    %v997 = vadd.f32 0.0, %v996
    %v998 = vpop.f32.mrf.mxu0
    %999 = vmatprep.mubr.bf16.mxu0 0
    %1000 = vmatmul.mubr.bf16.gmra.mxu0 %v792
    %v1001 = vpop.f32.mrf.mxu0
    %v1002 = vadd.f32 0.0, %v1001
    %v1003 = vpop.f32.mrf.mxu0
    %v1004 = vpop.f32.mrf.mxu0
    %v1005 = vadd.f32 0.0, %v1004
    %v1006 = vpop.f32.mrf.mxu0
    %1007 = vmatprep.mubr.bf16.mxu0 0
    %1008 = vmatmul.mubr.bf16.gmra.mxu0 %v793
    %v1009 = vpop.f32.mrf.mxu0
    %v1010 = vadd.f32 0.0, %v1009
    %v1011 = vpop.f32.mrf.mxu0
    %v1012 = vpop.f32.mrf.mxu0
    %v1013 = vadd.f32 0.0, %v1012
    %v1014 = vpop.f32.mrf.mxu0
    %1015 = vmatprep.mubr.bf16.mxu0 0
    %1016 = vmatmul.mubr.bf16.gmra.mxu0 %v794
    %v1017 = vpop.f32.mrf.mxu0
    %v1018 = vadd.f32 0.0, %v1017
    %v1019 = vpop.f32.mrf.mxu0
    %v1020 = vpop.f32.mrf.mxu0
    %v1021 = vadd.f32 0.0, %v1020
    %v1022 = vpop.f32.mrf.mxu0
    %1023 = vmatprep.mubr.bf16.mxu0 0
    %1024 = vmatmul.mubr.bf16.gmra.mxu0 %v795
    %v1025 = vpop.f32.mrf.mxu0
    %v1026 = vadd.f32 0.0, %v1025
    %v1027 = vpop.f32.mrf.mxu0
    %v1028 = vpop.f32.mrf.mxu0
    %v1029 = vadd.f32 0.0, %v1028
    %v1030 = vpop.f32.mrf.mxu0
    %1031 = vmatprep.mubr.bf16.mxu0 0
    %1032 = vmatmul.mubr.bf16.gmra.mxu0 %v796
    %v1033 = vpop.f32.mrf.mxu0
    %v1034 = vadd.f32 0.0, %v1033
    %v1035 = vpop.f32.mrf.mxu0
    %v1036 = vpop.f32.mrf.mxu0
    %v1037 = vadd.f32 0.0, %v1036
    %v1038 = vpop.f32.mrf.mxu0
    %1039 = vmatprep.mubr.bf16.mxu0 0
    %1040 = vmatmul.mubr.bf16.gmra.mxu0 %v797
    %v1041 = vpop.f32.mrf.mxu0
    %v1042 = vadd.f32 0.0, %v1041
    %v1043 = vpop.f32.mrf.mxu0
    %v1044 = vpop.f32.mrf.mxu0
    %v1045 = vadd.f32 0.0, %v1044
    %v1046 = vpop.f32.mrf.mxu0
    %1047 = vmatprep.mubr.bf16.mxu0 0
    %1048 = vmatmul.mubr.bf16.gmra.mxu0 %v798
    %v1049 = vpop.f32.mrf.mxu0
    %v1050 = vadd.f32 0.0, %v1049
    %v1051 = vpop.f32.mrf.mxu0
    %v1052 = vpop.f32.mrf.mxu0
    %v1053 = vadd.f32 0.0, %v1052
    %v1054 = vpop.f32.mrf.mxu0
    %1055 = vmatprep.mubr.bf16.mxu0 0
    %1056 = vmatmul.mubr.bf16.gmra.mxu0 %v831
    %v1057 = vpop.f32.mrf.mxu0
    %v1058 = vadd.f32 0.0, %v1057
    %v1059 = vpop.f32.mrf.mxu0
    %v1060 = vpop.f32.mrf.mxu0
    %v1061 = vadd.f32 0.0, %v1060
    %v1062 = vpop.f32.mrf.mxu0
    %1063 = vmatprep.mubr.bf16.mxu0 0
    %1064 = vmatmul.mubr.bf16.gmra.mxu0 %v832
    %v1065 = vpop.f32.mrf.mxu0
    %v1066 = vadd.f32 0.0, %v1065
    %v1067 = vpop.f32.mrf.mxu0
    %v1068 = vpop.f32.mrf.mxu0
    %v1069 = vadd.f32 0.0, %v1068
    %v1070 = vpop.f32.mrf.mxu0
    %1071 = vmatprep.mubr.bf16.mxu0 0
    %1072 = vmatmul.mubr.bf16.gmra.mxu0 %v833
    %v1073 = vpop.f32.mrf.mxu0
    %v1074 = vadd.f32 0.0, %v1073
    %v1075 = vpop.f32.mrf.mxu0
    %v1076 = vpop.f32.mrf.mxu0
    %v1077 = vadd.f32 0.0, %v1076
    %v1078 = vpop.f32.mrf.mxu0
    %1079 = vmatprep.mubr.bf16.mxu0 0
    %1080 = vmatmul.mubr.bf16.gmra.mxu0 %v834
    %v1081 = vpop.f32.mrf.mxu0
    %v1082 = vadd.f32 0.0, %v1081
    %v1083 = vpop.f32.mrf.mxu0
    %v1084 = vpop.f32.mrf.mxu0
    %v1085 = vadd.f32 0.0, %v1084
    %v1086 = vpop.f32.mrf.mxu0
    %1087 = vmatprep.mubr.bf16.mxu0 0
    %1088 = vmatmul.mubr.bf16.gmra.mxu0 %v835
    %v1089 = vpop.f32.mrf.mxu0
    %v1090 = vadd.f32 0.0, %v1089
    %v1091 = vpop.f32.mrf.mxu0
    %v1092 = vpop.f32.mrf.mxu0
    %v1093 = vadd.f32 0.0, %v1092
    %v1094 = vpop.f32.mrf.mxu0
    %1095 = vmatprep.mubr.bf16.mxu0 0
    %1096 = vmatmul.mubr.bf16.gmra.mxu0 %v836
    %v1097 = vpop.f32.mrf.mxu0
    %v1098 = vadd.f32 0.0, %v1097
    %v1099 = vpop.f32.mrf.mxu0
    %v1100 = vpop.f32.mrf.mxu0
    %v1101 = vadd.f32 0.0, %v1100
    %v1102 = vpop.f32.mrf.mxu0
    %1103 = vmatprep.mubr.bf16.mxu0 0
    %1104 = vmatmul.mubr.bf16.gmra.mxu0 %v837
    %v1105 = vpop.f32.mrf.mxu0
    %v1106 = vadd.f32 0.0, %v1105
    %v1107 = vpop.f32.mrf.mxu0
    %v1108 = vpop.f32.mrf.mxu0
    %v1109 = vadd.f32 0.0, %v1108
    %v1110 = vpop.f32.mrf.mxu0
    %1111 = vmatprep.mubr.bf16.mxu0 0
    %1112 = vmatmul.mubr.bf16.gmra.mxu0 %v838
    %v1113 = vpop.f32.mrf.mxu0
    %v1114 = vadd.f32 0.0, %v1113
    %v1115 = vpop.f32.mrf.mxu0
    %v1116 = vpop.f32.mrf.mxu0
    %v1117 = vadd.f32 0.0, %v1116
    %v1118 = vpop.f32.mrf.mxu0
    %1119 = vmatprep.mubr.bf16.mxu0 0
    %1120 = vmatmul.mubr.bf16.gmra.mxu0 %v839
    %v1121 = vpop.f32.mrf.mxu0
    %v1122 = vadd.f32 0.0, %v1121
    %v1123 = vpop.f32.mrf.mxu0
    %v1124 = vpop.f32.mrf.mxu0
    %v1125 = vadd.f32 0.0, %v1124
    %v1126 = vpop.f32.mrf.mxu0
    %1127 = vmatprep.mubr.bf16.mxu0 0
    %1128 = vmatmul.mubr.bf16.gmra.mxu0 %v840
    %v1129 = vpop.f32.mrf.mxu0
    %v1130 = vadd.f32 0.0, %v1129
    %v1131 = vpop.f32.mrf.mxu0
    %v1132 = vpop.f32.mrf.mxu0
    %v1133 = vadd.f32 0.0, %v1132
    %v1134 = vpop.f32.mrf.mxu0
    %1135 = vmatprep.mubr.bf16.mxu0 0
    %1136 = vmatmul.mubr.bf16.gmra.mxu0 %v841
    %v1137 = vpop.f32.mrf.mxu0
    %v1138 = vadd.f32 0.0, %v1137
    %v1139 = vpop.f32.mrf.mxu0
    %v1140 = vpop.f32.mrf.mxu0
    %v1141 = vadd.f32 0.0, %v1140
    %v1142 = vpop.f32.mrf.mxu0
    %1143 = vmatprep.mubr.bf16.mxu0 0
    %1144 = vmatmul.mubr.bf16.gmra.mxu0 %v842
    %v1145 = vpop.f32.mrf.mxu0
    %v1146 = vadd.f32 0.0, %v1145
    %v1147 = vpop.f32.mrf.mxu0
    %v1148 = vpop.f32.mrf.mxu0
    %v1149 = vadd.f32 0.0, %v1148
    %v1150 = vpop.f32.mrf.mxu0
    %1151 = vmatprep.mubr.bf16.mxu0 0
    %1152 = vmatmul.mubr.bf16.gmra.mxu0 %v843
    %v1153 = vpop.f32.mrf.mxu0
    %v1154 = vadd.f32 0.0, %v1153
    %v1155 = vpop.f32.mrf.mxu0
    %v1156 = vpop.f32.mrf.mxu0
    %v1157 = vadd.f32 0.0, %v1156
    %v1158 = vpop.f32.mrf.mxu0
    %1159 = vmatprep.mubr.bf16.mxu0 0
    %1160 = vmatmul.mubr.bf16.gmra.mxu0 %v844
    %v1161 = vpop.f32.mrf.mxu0
    %v1162 = vadd.f32 0.0, %v1161
    %v1163 = vpop.f32.mrf.mxu0
    %v1164 = vpop.f32.mrf.mxu0
    %v1165 = vadd.f32 0.0, %v1164
    %v1166 = vpop.f32.mrf.mxu0
    %1167 = vmatprep.mubr.bf16.mxu0 0
    %1168 = vmatmul.mubr.bf16.gmra.mxu0 %v845
    %v1169 = vpop.f32.mrf.mxu0
    %v1170 = vadd.f32 0.0, %v1169
    %v1171 = vpop.f32.mrf.mxu0
    %v1172 = vpop.f32.mrf.mxu0
    %v1173 = vadd.f32 0.0, %v1172
    %v1174 = vpop.f32.mrf.mxu0
    %1175 = vmatprep.mubr.bf16.mxu0 0
    %1176 = vmatmul.mubr.bf16.gmra.mxu0 %v846
    %v1177 = vpop.f32.mrf.mxu0
    %v1178 = vadd.f32 0.0, %v1177
    %v1179 = vpop.f32.mrf.mxu0
    %v1180 = vpop.f32.mrf.mxu0
    %v1181 = vadd.f32 0.0, %v1180
    %v1182 = vpop.f32.mrf.mxu0
    %1183 = vdwg.mxu0
    %v1184 = vmul.f32 %v930, %v1058
    %v1185 = vmul.f32 %v933, %v1061
    %v1186 = vmul.f32 %v938, %v1066
    %v1187 = vmul.f32 %v941, %v1069
    %v1188 = vmul.f32 %v946, %v1074
    %v1189 = vmul.f32 %v949, %v1077
    %v1190 = vmul.f32 %v954, %v1082
    %v1191 = vmul.f32 %v957, %v1085
    %v1192 = vmul.f32 %v962, %v1090
    %v1193 = vmul.f32 %v965, %v1093
    %v1194 = vmul.f32 %v970, %v1098
    %v1195 = vmul.f32 %v973, %v1101
    %v1196 = vmul.f32 %v978, %v1106
    %v1197 = vmul.f32 %v981, %v1109
    %v1198 = vmul.f32 %v986, %v1114
    %v1199 = vmul.f32 %v989, %v1117
    %v1200 = vmul.f32 %v994, %v1122
    %v1201 = vmul.f32 %v997, %v1125
    %v1202 = vmul.f32 %v1002, %v1130
    %v1203 = vmul.f32 %v1005, %v1133
    %v1204 = vmul.f32 %v1010, %v1138
    %v1205 = vmul.f32 %v1013, %v1141
    %v1206 = vmul.f32 %v1018, %v1146
    %v1207 = vmul.f32 %v1021, %v1149
    %v1208 = vmul.f32 %v1026, %v1154
    %v1209 = vmul.f32 %v1029, %v1157
    %v1210 = vmul.f32 %v1034, %v1162
    %v1211 = vmul.f32 %v1037, %v1165
    %v1212 = vmul.f32 %v1042, %v1170
    %v1213 = vmul.f32 %v1045, %v1173
    %v1214 = vmul.f32 %v1050, %v1178
    %v1215 = vmul.f32 %v1053, %v1181
    %1216 = vadd.xlane.f32.xlu0 %v1184
    %v1217 = vpop.xlane.xlu0 %1216
    %1218 = vadd.xlane.f32.xlu0 %v1185
    %v1219 = vpop.xlane.xlu0 %1218
    %1220 = vadd.xlane.f32.xlu0 %v1186
    %v1221 = vpop.xlane.xlu0 %1220
    %1222 = vadd.xlane.f32.xlu0 %v1187
    %v1223 = vpop.xlane.xlu0 %1222
    %1224 = vadd.xlane.f32.xlu0 %v1188
    %v1225 = vpop.xlane.xlu0 %1224
    %1226 = vadd.xlane.f32.xlu0 %v1189
    %v1227 = vpop.xlane.xlu0 %1226
    %1228 = vadd.xlane.f32.xlu0 %v1190
    %v1229 = vpop.xlane.xlu0 %1228
    %1230 = vadd.xlane.f32.xlu0 %v1191
    %v1231 = vpop.xlane.xlu0 %1230
    %1232 = vadd.xlane.f32.xlu0 %v1192
    %v1233 = vpop.xlane.xlu0 %1232
    %1234 = vadd.xlane.f32.xlu0 %v1193
    %v1235 = vpop.xlane.xlu0 %1234
    %1236 = vadd.xlane.f32.xlu0 %v1194
    %v1237 = vpop.xlane.xlu0 %1236
    %1238 = vadd.xlane.f32.xlu0 %v1195
    %v1239 = vpop.xlane.xlu0 %1238
    %1240 = vadd.xlane.f32.xlu0 %v1196
    %v1241 = vpop.xlane.xlu0 %1240
    %1242 = vadd.xlane.f32.xlu0 %v1197
    %v1243 = vpop.xlane.xlu0 %1242
    %1244 = vadd.xlane.f32.xlu0 %v1198
    %v1245 = vpop.xlane.xlu0 %1244
    %1246 = vadd.xlane.f32.xlu0 %v1199
    %v1247 = vpop.xlane.xlu0 %1246
    %1248 = vadd.xlane.f32.xlu0 %v1200
    %v1249 = vpop.xlane.xlu0 %1248
    %1250 = vadd.xlane.f32.xlu0 %v1201
    %v1251 = vpop.xlane.xlu0 %1250
    %1252 = vadd.xlane.f32.xlu0 %v1202
    %v1253 = vpop.xlane.xlu0 %1252
    %1254 = vadd.xlane.f32.xlu0 %v1203
    %v1255 = vpop.xlane.xlu0 %1254
    %1256 = vadd.xlane.f32.xlu0 %v1204
    %v1257 = vpop.xlane.xlu0 %1256
    %1258 = vadd.xlane.f32.xlu0 %v1205
    %v1259 = vpop.xlane.xlu0 %1258
    %1260 = vadd.xlane.f32.xlu0 %v1206
    %v1261 = vpop.xlane.xlu0 %1260
    %1262 = vadd.xlane.f32.xlu0 %v1207
    %v1263 = vpop.xlane.xlu0 %1262
    %1264 = vadd.xlane.f32.xlu0 %v1208
    %v1265 = vpop.xlane.xlu0 %1264
    %1266 = vadd.xlane.f32.xlu0 %v1209
    %v1267 = vpop.xlane.xlu0 %1266
    %1268 = vadd.xlane.f32.xlu0 %v1210
    %v1269 = vpop.xlane.xlu0 %1268
    %1270 = vadd.xlane.f32.xlu0 %v1211
    %v1271 = vpop.xlane.xlu0 %1270
    %1272 = vadd.xlane.f32.xlu0 %v1212
    %v1273 = vpop.xlane.xlu0 %1272
    %1274 = vadd.xlane.f32.xlu0 %v1213
    %v1275 = vpop.xlane.xlu0 %1274
    %1276 = vadd.xlane.f32.xlu0 %v1214
    %v1277 = vpop.xlane.xlu0 %1276
    %1278 = vadd.xlane.f32.xlu0 %v1215
    %v1279 = vpop.xlane.xlu0 %1278
    %v1280 = vadd.f32 %v1217, 0.2
    %v1281 = vadd.f32 %v1219, 0.2
    %v1282 = vadd.f32 %v1221, 0.2
    %v1283 = vadd.f32 %v1223, 0.2
    %v1284 = vadd.f32 %v1225, 0.2
    %v1285 = vadd.f32 %v1227, 0.2
    %v1286 = vadd.f32 %v1229, 0.2
    %v1287 = vadd.f32 %v1231, 0.2
    %v1288 = vadd.f32 %v1233, 0.2
    %v1289 = vadd.f32 %v1235, 0.2
    %v1290 = vadd.f32 %v1237, 0.2
    %v1291 = vadd.f32 %v1239, 0.2
    %v1292 = vadd.f32 %v1241, 0.2
    %v1293 = vadd.f32 %v1243, 0.2
    %v1294 = vadd.f32 %v1245, 0.2
    %v1295 = vadd.f32 %v1247, 0.2
    %v1296 = vadd.f32 %v1249, 0.2
    %v1297 = vadd.f32 %v1251, 0.2
    %v1298 = vadd.f32 %v1253, 0.2
    %v1299 = vadd.f32 %v1255, 0.2
    %v1300 = vadd.f32 %v1257, 0.2
    %v1301 = vadd.f32 %v1259, 0.2
    %v1302 = vadd.f32 %v1261, 0.2
    %v1303 = vadd.f32 %v1263, 0.2
    %v1304 = vadd.f32 %v1265, 0.2
    %v1305 = vadd.f32 %v1267, 0.2
    %v1306 = vadd.f32 %v1269, 0.2
    %v1307 = vadd.f32 %v1271, 0.2
    %v1308 = vadd.f32 %v1273, 0.2
    %v1309 = vadd.f32 %v1275, 0.2
    %v1310 = vadd.f32 %v1277, 0.2
    %v1311 = vadd.f32 %v1279, 0.2
    %v1312 = vmax.f32 %v1280, 0.0
    %v1313 = vmax.f32 %v1281, 0.0
    %v1314 = vmax.f32 %v1282, 0.0
    %v1315 = vmax.f32 %v1283, 0.0
    %v1316 = vmax.f32 %v1284, 0.0
    %v1317 = vmax.f32 %v1285, 0.0
    %v1318 = vmax.f32 %v1286, 0.0
    %v1319 = vmax.f32 %v1287, 0.0
    %v1320 = vmax.f32 %v1288, 0.0
    %v1321 = vmax.f32 %v1289, 0.0
    %v1322 = vmax.f32 %v1290, 0.0
    %v1323 = vmax.f32 %v1291, 0.0
    %v1324 = vmax.f32 %v1292, 0.0
    %v1325 = vmax.f32 %v1293, 0.0
    %v1326 = vmax.f32 %v1294, 0.0
    %v1327 = vmax.f32 %v1295, 0.0
    %v1328 = vmax.f32 %v1296, 0.0
    %v1329 = vmax.f32 %v1297, 0.0
    %v1330 = vmax.f32 %v1298, 0.0
    %v1331 = vmax.f32 %v1299, 0.0
    %v1332 = vmax.f32 %v1300, 0.0
    %v1333 = vmax.f32 %v1301, 0.0
    %v1334 = vmax.f32 %v1302, 0.0
    %v1335 = vmax.f32 %v1303, 0.0
    %v1336 = vmax.f32 %v1304, 0.0
    %v1337 = vmax.f32 %v1305, 0.0
    %v1338 = vmax.f32 %v1306, 0.0
    %v1339 = vmax.f32 %v1307, 0.0
    %v1340 = vmax.f32 %v1308, 0.0
    %v1341 = vmax.f32 %v1309, 0.0
    %v1342 = vmax.f32 %v1310, 0.0
    %v1343 = vmax.f32 %v1311, 0.0
    %s1344 = smul.u32 0, 256
    %v1345 = vlaneseq
    %v1346 = vshrl.u32 %v1345, 7
    %v1347 = vadd.s32 %v1346, 8
    %v1348 = vadd.s32 %v1346, 16
    %v1349 = vadd.s32 %v1346, 24
    %v1350 = vadd.s32 %v1346, 32
    %v1351 = vadd.s32 %v1346, 40
    %v1352 = vadd.s32 %v1346, 48
    %v1353 = vadd.s32 %v1346, 56
    %v1354 = vadd.s32 %v1346, 64
    %v1355 = vadd.s32 %v1346, 72
    %v1356 = vadd.s32 %v1346, 80
    %v1357 = vadd.s32 %v1346, 88
    %v1358 = vadd.s32 %v1346, 96
    %v1359 = vadd.s32 %v1346, 104
    %v1360 = vadd.s32 %v1346, 112
    %v1361 = vadd.s32 %v1346, 120
    %v1362 = vadd.s32 %v1346, 128
    %v1363 = vadd.s32 %v1346, 136
    %v1364 = vadd.s32 %v1346, 144
    %v1365 = vadd.s32 %v1346, 152
    %v1366 = vadd.s32 %v1346, 160
    %v1367 = vadd.s32 %v1346, 168
    %v1368 = vadd.s32 %v1346, 176
    %v1369 = vadd.s32 %v1346, 184
    %v1370 = vadd.s32 %v1346, 192
    %v1371 = vadd.s32 %v1346, 200
    %v1372 = vadd.s32 %v1346, 208
    %v1373 = vadd.s32 %v1346, 216
    %v1374 = vadd.s32 %v1346, 224
    %v1375 = vadd.s32 %v1346, 232
    %v1376 = vadd.s32 %v1346, 240
    %v1377 = vadd.s32 %v1346, 248
    %v1378 = vstv %s1344
    %v1379 = vadd.s32 %v1378, %v1346
    %v1380 = vadd.s32 %v1378, %v1347
    %v1381 = vadd.s32 %v1378, %v1348
    %v1382 = vadd.s32 %v1378, %v1349
    %v1383 = vadd.s32 %v1378, %v1350
    %v1384 = vadd.s32 %v1378, %v1351
    %v1385 = vadd.s32 %v1378, %v1352
    %v1386 = vadd.s32 %v1378, %v1353
    %v1387 = vadd.s32 %v1378, %v1354
    %v1388 = vadd.s32 %v1378, %v1355
    %v1389 = vadd.s32 %v1378, %v1356
    %v1390 = vadd.s32 %v1378, %v1357
    %v1391 = vadd.s32 %v1378, %v1358
    %v1392 = vadd.s32 %v1378, %v1359
    %v1393 = vadd.s32 %v1378, %v1360
    %v1394 = vadd.s32 %v1378, %v1361
    %v1395 = vadd.s32 %v1378, %v1362
    %v1396 = vadd.s32 %v1378, %v1363
    %v1397 = vadd.s32 %v1378, %v1364
    %v1398 = vadd.s32 %v1378, %v1365
    %v1399 = vadd.s32 %v1378, %v1366
    %v1400 = vadd.s32 %v1378, %v1367
    %v1401 = vadd.s32 %v1378, %v1368
    %v1402 = vadd.s32 %v1378, %v1369
    %v1403 = vadd.s32 %v1378, %v1370
    %v1404 = vadd.s32 %v1378, %v1371
    %v1405 = vadd.s32 %v1378, %v1372
    %v1406 = vadd.s32 %v1378, %v1373
    %v1407 = vadd.s32 %v1378, %v1374
    %v1408 = vadd.s32 %v1378, %v1375
    %v1409 = vadd.s32 %v1378, %v1376
    %v1410 = vadd.s32 %v1378, %v1377
    %vm1411 = vcmp.lt.s32.totalorder %v1379, 32
    %vm1412 = vcmp.lt.s32.totalorder %v1380, 32
    %vm1413 = vcmp.lt.s32.totalorder %v1381, 32
    %vm1414 = vcmp.lt.s32.totalorder %v1382, 32
    %vm1415 = vcmp.lt.s32.totalorder %v1383, 32
    %vm1416 = vcmp.lt.s32.totalorder %v1384, 32
    %vm1417 = vcmp.lt.s32.totalorder %v1385, 32
    %vm1418 = vcmp.lt.s32.totalorder %v1386, 32
    %vm1419 = vcmp.lt.s32.totalorder %v1387, 32
    %vm1420 = vcmp.lt.s32.totalorder %v1388, 32
    %vm1421 = vcmp.lt.s32.totalorder %v1389, 32
    %vm1422 = vcmp.lt.s32.totalorder %v1390, 32
    %vm1423 = vcmp.lt.s32.totalorder %v1391, 32
    %vm1424 = vcmp.lt.s32.totalorder %v1392, 32
    %vm1425 = vcmp.lt.s32.totalorder %v1393, 32
    %vm1426 = vcmp.lt.s32.totalorder %v1394, 32
    %vm1427 = vcmp.lt.s32.totalorder %v1395, 32
    %vm1428 = vcmp.lt.s32.totalorder %v1396, 32
    %vm1429 = vcmp.lt.s32.totalorder %v1397, 32
    %vm1430 = vcmp.lt.s32.totalorder %v1398, 32
    %vm1431 = vcmp.lt.s32.totalorder %v1399, 32
    %vm1432 = vcmp.lt.s32.totalorder %v1400, 32
    %vm1433 = vcmp.lt.s32.totalorder %v1401, 32
    %vm1434 = vcmp.lt.s32.totalorder %v1402, 32
    %vm1435 = vcmp.lt.s32.totalorder %v1403, 32
    %vm1436 = vcmp.lt.s32.totalorder %v1404, 32
    %vm1437 = vcmp.lt.s32.totalorder %v1405, 32
    %vm1438 = vcmp.lt.s32.totalorder %v1406, 32
    %vm1439 = vcmp.lt.s32.totalorder %v1407, 32
    %vm1440 = vcmp.lt.s32.totalorder %v1408, 32
    %vm1441 = vcmp.lt.s32.totalorder %v1409, 32
    %vm1442 = vcmp.lt.s32.totalorder %v1410, 32
    %v1443 = vsel %vm1411, %v1312, 0.0
    %v1444 = vsel %vm1412, %v1313, 0.0
    %v1445 = vsel %vm1413, %v1314, 0.0
    %v1446 = vsel %vm1414, %v1315, 0.0
    %v1447 = vsel %vm1415, %v1316, 0.0
    %v1448 = vsel %vm1416, %v1317, 0.0
    %v1449 = vsel %vm1417, %v1318, 0.0
    %v1450 = vsel %vm1418, %v1319, 0.0
    %v1451 = vsel %vm1419, %v1320, 0.0
    %v1452 = vsel %vm1420, %v1321, 0.0
    %v1453 = vsel %vm1421, %v1322, 0.0
    %v1454 = vsel %vm1422, %v1323, 0.0
    %v1455 = vsel %vm1423, %v1324, 0.0
    %v1456 = vsel %vm1424, %v1325, 0.0
    %v1457 = vsel %vm1425, %v1326, 0.0
    %v1458 = vsel %vm1426, %v1327, 0.0
    %v1459 = vsel %vm1427, %v1328, 0.0
    %v1460 = vsel %vm1428, %v1329, 0.0
    %v1461 = vsel %vm1429, %v1330, 0.0
    %v1462 = vsel %vm1430, %v1331, 0.0
    %v1463 = vsel %vm1431, %v1332, 0.0
    %v1464 = vsel %vm1432, %v1333, 0.0
    %v1465 = vsel %vm1433, %v1334, 0.0
    %v1466 = vsel %vm1434, %v1335, 0.0
    %v1467 = vsel %vm1435, %v1336, 0.0
    %v1468 = vsel %vm1436, %v1337, 0.0
    %v1469 = vsel %vm1437, %v1338, 0.0
    %v1470 = vsel %vm1438, %v1339, 0.0
    %v1471 = vsel %vm1439, %v1340, 0.0
    %v1472 = vsel %vm1440, %v1341, 0.0
    %v1473 = vsel %vm1441, %v1342, 0.0
    %v1474 = vsel %vm1442, %v1343, 0.0
    %v1475 = vld [vmem:[#allocation3] sm:$0xff]
    %v1476 = vld [vmem:[#allocation3 + $0x8] sm:$0xff]
    %v1477 = vld [vmem:[#allocation3 + $0x10] sm:$0xff]
    %v1478 = vld [vmem:[#allocation3 + $0x18] sm:$0xff]
    %v1479 = vld [vmem:[#allocation3 + $0x20] sm:$0xff]
    %v1480 = vld [vmem:[#allocation3 + $0x28] sm:$0xff]
    %v1481 = vld [vmem:[#allocation3 + $0x30] sm:$0xff]
    %v1482 = vld [vmem:[#allocation3 + $0x38] sm:$0xff]
    %v1483 = vld [vmem:[#allocation3 + $0x40] sm:$0xff]
    %v1484 = vld [vmem:[#allocation3 + $0x48] sm:$0xff]
    %v1485 = vld [vmem:[#allocation3 + $0x50] sm:$0xff]
    %v1486 = vld [vmem:[#allocation3 + $0x58] sm:$0xff]
    %v1487 = vld [vmem:[#allocation3 + $0x60] sm:$0xff]
    %v1488 = vld [vmem:[#allocation3 + $0x68] sm:$0xff]
    %v1489 = vld [vmem:[#allocation3 + $0x70] sm:$0xff]
    %v1490 = vld [vmem:[#allocation3 + $0x78] sm:$0xff]
    %v1491 = vld [vmem:[#allocation3 + $0x80] sm:$0xff]
    %v1492 = vld [vmem:[#allocation3 + $0x88] sm:$0xff]
    %v1493 = vld [vmem:[#allocation3 + $0x90] sm:$0xff]
    %v1494 = vld [vmem:[#allocation3 + $0x98] sm:$0xff]
    %v1495 = vld [vmem:[#allocation3 + $0xa0] sm:$0xff]
    %v1496 = vld [vmem:[#allocation3 + $0xa8] sm:$0xff]
    %v1497 = vld [vmem:[#allocation3 + $0xb0] sm:$0xff]
    %v1498 = vld [vmem:[#allocation3 + $0xb8] sm:$0xff]
    %v1499 = vld [vmem:[#allocation3 + $0xc0] sm:$0xff]
    %v1500 = vld [vmem:[#allocation3 + $0xc8] sm:$0xff]
    %v1501 = vld [vmem:[#allocation3 + $0xd0] sm:$0xff]
    %v1502 = vld [vmem:[#allocation3 + $0xd8] sm:$0xff]
    %v1503 = vld [vmem:[#allocation3 + $0xe0] sm:$0xff]
    %v1504 = vld [vmem:[#allocation3 + $0xe8] sm:$0xff]
    %v1505 = vld [vmem:[#allocation3 + $0xf0] sm:$0xff]
    %v1506 = vld [vmem:[#allocation3 + $0xf8] sm:$0xff]
    %v1507 = vadd.f32 %v1475, %v1443
    %v1508 = vadd.f32 %v1476, %v1444
    %v1509 = vadd.f32 %v1477, %v1445
    %v1510 = vadd.f32 %v1478, %v1446
    %v1511 = vadd.f32 %v1479, %v1447
    %v1512 = vadd.f32 %v1480, %v1448
    %v1513 = vadd.f32 %v1481, %v1449
    %v1514 = vadd.f32 %v1482, %v1450
    %v1515 = vadd.f32 %v1483, %v1451
    %v1516 = vadd.f32 %v1484, %v1452
    %v1517 = vadd.f32 %v1485, %v1453
    %v1518 = vadd.f32 %v1486, %v1454
    %v1519 = vadd.f32 %v1487, %v1455
    %v1520 = vadd.f32 %v1488, %v1456
    %v1521 = vadd.f32 %v1489, %v1457
    %v1522 = vadd.f32 %v1490, %v1458
    %v1523 = vadd.f32 %v1491, %v1459
    %v1524 = vadd.f32 %v1492, %v1460
    %v1525 = vadd.f32 %v1493, %v1461
    %v1526 = vadd.f32 %v1494, %v1462
    %v1527 = vadd.f32 %v1495, %v1463
    %v1528 = vadd.f32 %v1496, %v1464
    %v1529 = vadd.f32 %v1497, %v1465
    %v1530 = vadd.f32 %v1498, %v1466
    %v1531 = vadd.f32 %v1499, %v1467
    %v1532 = vadd.f32 %v1500, %v1468
    %v1533 = vadd.f32 %v1501, %v1469
    %v1534 = vadd.f32 %v1502, %v1470
    %v1535 = vadd.f32 %v1503, %v1471
    %v1536 = vadd.f32 %v1504, %v1472
    %v1537 = vadd.f32 %v1505, %v1473
    %v1538 = vadd.f32 %v1506, %v1474
    %vm1539 = vcmask 7168
    %1540 = vst.msk [vmem:[#allocation3] sm:$0xff] %vm1539, %v1507
    %1541 = vst.msk [vmem:[#allocation3 + $0x8] sm:$0xff] %vm1539, %v1508
    %1542 = vst.msk [vmem:[#allocation3 + $0x10] sm:$0xff] %vm1539, %v1509
    %1543 = vst.msk [vmem:[#allocation3 + $0x18] sm:$0xff] %vm1539, %v1510
    %1544 = vst.msk [vmem:[#allocation3 + $0x20] sm:$0xff] %vm1539, %v1511
    %1545 = vst.msk [vmem:[#allocation3 + $0x28] sm:$0xff] %vm1539, %v1512
    %1546 = vst.msk [vmem:[#allocation3 + $0x30] sm:$0xff] %vm1539, %v1513
    %1547 = vst.msk [vmem:[#allocation3 + $0x38] sm:$0xff] %vm1539, %v1514
    %1548 = vst.msk [vmem:[#allocation3 + $0x40] sm:$0xff] %vm1539, %v1515
    %1549 = vst.msk [vmem:[#allocation3 + $0x48] sm:$0xff] %vm1539, %v1516
    %1550 = vst.msk [vmem:[#allocation3 + $0x50] sm:$0xff] %vm1539, %v1517
    %1551 = vst.msk [vmem:[#allocation3 + $0x58] sm:$0xff] %vm1539, %v1518
    %1552 = vst.msk [vmem:[#allocation3 + $0x60] sm:$0xff] %vm1539, %v1519
    %1553 = vst.msk [vmem:[#allocation3 + $0x68] sm:$0xff] %vm1539, %v1520
    %1554 = vst.msk [vmem:[#allocation3 + $0x70] sm:$0xff] %vm1539, %v1521
    %1555 = vst.msk [vmem:[#allocation3 + $0x78] sm:$0xff] %vm1539, %v1522
    %1556 = vst.msk [vmem:[#allocation3 + $0x80] sm:$0xff] %vm1539, %v1523
    %1557 = vst.msk [vmem:[#allocation3 + $0x88] sm:$0xff] %vm1539, %v1524
    %1558 = vst.msk [vmem:[#allocation3 + $0x90] sm:$0xff] %vm1539, %v1525
    %1559 = vst.msk [vmem:[#allocation3 + $0x98] sm:$0xff] %vm1539, %v1526
    %1560 = vst.msk [vmem:[#allocation3 + $0xa0] sm:$0xff] %vm1539, %v1527
    %1561 = vst.msk [vmem:[#allocation3 + $0xa8] sm:$0xff] %vm1539, %v1528
    %1562 = vst.msk [vmem:[#allocation3 + $0xb0] sm:$0xff] %vm1539, %v1529
    %1563 = vst.msk [vmem:[#allocation3 + $0xb8] sm:$0xff] %vm1539, %v1530
    %1564 = vst.msk [vmem:[#allocation3 + $0xc0] sm:$0xff] %vm1539, %v1531
    %1565 = vst.msk [vmem:[#allocation3 + $0xc8] sm:$0xff] %vm1539, %v1532
    %1566 = vst.msk [vmem:[#allocation3 + $0xd0] sm:$0xff] %vm1539, %v1533
    %1567 = vst.msk [vmem:[#allocation3 + $0xd8] sm:$0xff] %vm1539, %v1534
    %1568 = vst.msk [vmem:[#allocation3 + $0xe0] sm:$0xff] %vm1539, %v1535
    %1569 = vst.msk [vmem:[#allocation3 + $0xe8] sm:$0xff] %vm1539, %v1536
    %1570 = vst.msk [vmem:[#allocation3 + $0xf0] sm:$0xff] %vm1539, %v1537
    %1571 = vst.msk [vmem:[#allocation3 + $0xf8] sm:$0xff] %vm1539, %v1538
    // Predicated region
    $region44: #{tpu_custom_call.1} parent=1 // pred_check
      %p1572 = pneg %p11
    $region45: #{tpu_custom_call.1} parent=1 // pred_check_branch
      %1574 = sbr.rel (%p1572) target = $region47
    $region46: #{tpu_custom_call.1} parent=1 // pred_region
      %v1575 = vld [vmem:[#allocation3] sm:$0xff]
      %v1576 = vld [vmem:[#allocation3 + $0x8] sm:$0xff]
      %v1577 = vld [vmem:[#allocation3 + $0x10] sm:$0xff]
      %v1578 = vld [vmem:[#allocation3 + $0x18] sm:$0xff]
      %v1579 = vld [vmem:[#allocation3 + $0x20] sm:$0xff]
      %v1580 = vld [vmem:[#allocation3 + $0x28] sm:$0xff]
      %v1581 = vld [vmem:[#allocation3 + $0x30] sm:$0xff]
      %v1582 = vld [vmem:[#allocation3 + $0x38] sm:$0xff]
      %v1583 = vld [vmem:[#allocation3 + $0x40] sm:$0xff]
      %v1584 = vld [vmem:[#allocation3 + $0x48] sm:$0xff]
      %v1585 = vld [vmem:[#allocation3 + $0x50] sm:$0xff]
      %v1586 = vld [vmem:[#allocation3 + $0x58] sm:$0xff]
      %v1587 = vld [vmem:[#allocation3 + $0x60] sm:$0xff]
      %v1588 = vld [vmem:[#allocation3 + $0x68] sm:$0xff]
      %v1589 = vld [vmem:[#allocation3 + $0x70] sm:$0xff]
      %v1590 = vld [vmem:[#allocation3 + $0x78] sm:$0xff]
      %v1591 = vld [vmem:[#allocation3 + $0x80] sm:$0xff]
      %v1592 = vld [vmem:[#allocation3 + $0x88] sm:$0xff]
      %v1593 = vld [vmem:[#allocation3 + $0x90] sm:$0xff]
      %v1594 = vld [vmem:[#allocation3 + $0x98] sm:$0xff]
      %v1595 = vld [vmem:[#allocation3 + $0xa0] sm:$0xff]
      %v1596 = vld [vmem:[#allocation3 + $0xa8] sm:$0xff]
      %v1597 = vld [vmem:[#allocation3 + $0xb0] sm:$0xff]
      %v1598 = vld [vmem:[#allocation3 + $0xb8] sm:$0xff]
      %v1599 = vld [vmem:[#allocation3 + $0xc0] sm:$0xff]
      %v1600 = vld [vmem:[#allocation3 + $0xc8] sm:$0xff]
      %v1601 = vld [vmem:[#allocation3 + $0xd0] sm:$0xff]
      %v1602 = vld [vmem:[#allocation3 + $0xd8] sm:$0xff]
      %v1603 = vld [vmem:[#allocation3 + $0xe0] sm:$0xff]
      %v1604 = vld [vmem:[#allocation3 + $0xe8] sm:$0xff]
      %v1605 = vld [vmem:[#allocation3 + $0xf0] sm:$0xff]
      %v1606 = vld [vmem:[#allocation3 + $0xf8] sm:$0xff]
      %v1607 = vsel %vm1539, %v1575, 0.0
      %v1608 = vsel %vm1539, %v1576, 0.0
      %v1609 = vadd.f32 %v1607, %v1608
      %v1610 = vsel %vm1539, %v1577, 0.0
      %v1611 = vadd.f32 %v1609, %v1610
      %v1612 = vsel %vm1539, %v1578, 0.0
      %v1613 = vadd.f32 %v1611, %v1612
      %v1614 = vsel %vm1539, %v1579, 0.0
      %v1615 = vadd.f32 %v1613, %v1614
      %v1616 = vsel %vm1539, %v1580, 0.0
      %v1617 = vadd.f32 %v1615, %v1616
      %v1618 = vsel %vm1539, %v1581, 0.0
      %v1619 = vadd.f32 %v1617, %v1618
      %v1620 = vsel %vm1539, %v1582, 0.0
      %v1621 = vadd.f32 %v1619, %v1620
      %v1622 = vsel %vm1539, %v1583, 0.0
      %v1623 = vadd.f32 %v1621, %v1622
      %v1624 = vsel %vm1539, %v1584, 0.0
      %v1625 = vadd.f32 %v1623, %v1624
      %v1626 = vsel %vm1539, %v1585, 0.0
      %v1627 = vadd.f32 %v1625, %v1626
      %v1628 = vsel %vm1539, %v1586, 0.0
      %v1629 = vadd.f32 %v1627, %v1628
      %v1630 = vsel %vm1539, %v1587, 0.0
      %v1631 = vadd.f32 %v1629, %v1630
      %v1632 = vsel %vm1539, %v1588, 0.0
      %v1633 = vadd.f32 %v1631, %v1632
      %v1634 = vsel %vm1539, %v1589, 0.0
      %v1635 = vadd.f32 %v1633, %v1634
      %v1636 = vsel %vm1539, %v1590, 0.0
      %v1637 = vadd.f32 %v1635, %v1636
      %v1638 = vsel %vm1539, %v1591, 0.0
      %v1639 = vadd.f32 %v1637, %v1638
      %v1640 = vsel %vm1539, %v1592, 0.0
      %v1641 = vadd.f32 %v1639, %v1640
      %v1642 = vsel %vm1539, %v1593, 0.0
      %v1643 = vadd.f32 %v1641, %v1642
      %v1644 = vsel %vm1539, %v1594, 0.0
      %v1645 = vadd.f32 %v1643, %v1644
      %v1646 = vsel %vm1539, %v1595, 0.0
      %v1647 = vadd.f32 %v1645, %v1646
      %v1648 = vsel %vm1539, %v1596, 0.0
      %v1649 = vadd.f32 %v1647, %v1648
      %v1650 = vsel %vm1539, %v1597, 0.0
      %v1651 = vadd.f32 %v1649, %v1650
      %v1652 = vsel %vm1539, %v1598, 0.0
      %v1653 = vadd.f32 %v1651, %v1652
      %v1654 = vsel %vm1539, %v1599, 0.0
      %v1655 = vadd.f32 %v1653, %v1654
      %v1656 = vsel %vm1539, %v1600, 0.0
      %v1657 = vadd.f32 %v1655, %v1656
      %v1658 = vsel %vm1539, %v1601, 0.0
      %v1659 = vadd.f32 %v1657, %v1658
      %v1660 = vsel %vm1539, %v1602, 0.0
      %v1661 = vadd.f32 %v1659, %v1660
      %v1662 = vsel %vm1539, %v1603, 0.0
      %v1663 = vadd.f32 %v1661, %v1662
      %v1664 = vsel %vm1539, %v1604, 0.0
      %v1665 = vadd.f32 %v1663, %v1664
      %v1666 = vsel %vm1539, %v1605, 0.0
      %v1667 = vadd.f32 %v1665, %v1666
      %v1668 = vsel %vm1539, %v1606, 0.0
      %v1669 = vadd.f32 %v1667, %v1668
      %v1670 = vrot.slane %v1669, 4
      %v1671 = vadd.f32 %v1669, %v1670
      %v1672 = vrot.slane %v1671, 2
      %v1673 = vadd.f32 %v1671, %v1672
      %v1674 = vrot.slane %v1673, 1
      %v1675 = vadd.f32 %v1673, %v1674
      %v1676 = vmul.f32 %v1675, 0.03125
      %vm1677 = vcmask 0
      %1678 = vst.msk [vmem:[#allocation5] sm:$0x1] %vm1677, %v1676
    $region47: #{tpu_custom_call.1} parent=1 // pred_fallthru
      _
    // Predicated region
    $region48: #{tpu_custom_call.1} parent=1 // pred_check
      _
    $region49: #{tpu_custom_call.1} parent=1 // pred_check_branch
      %1680 = sbr.rel (0) target = $region51
    $region50: #{tpu_custom_call.1} parent=1 // pred_region
      %s1682 = ssub.s32 16, 16
      %1683 = vsyncadd [#allocation6], %s1682
      %s1685 = sshll.u32 [#allocation5], 4
      %s1686 = int_to_ptr.vmem [resolvable:$true] %s1685
      %1688 = dma.vmem_to_hbm [thread:$0]  %s1686, 16, %s2, [#allocation6]
    $region51: #{tpu_custom_call.1} parent=1 // pred_fallthru
      _
    // Predicated region
    $region52: #{tpu_custom_call.1} parent=1 // pred_check
      _
    $region53: #{tpu_custom_call.1} parent=1 // pred_check_branch
      %1690 = sbr.rel (0) target = $region55
    $region54: #{tpu_custom_call.1} parent=1 // pred_region
      %1691 = dma.done [#allocation6], 16
    $region55: #{tpu_custom_call.1} parent=1 // pred_fallthru
      _
    %1692 = vsyncpa [#allocation6], 1
  %1693 = vsyncmov [#allocation4]
  %s1694 = vpop.sfrf %1693
  %p1695 = scmp.eq.s32.totalorder %s1694, 0
  %p1696 = pneg %p1695
  %1698 = shalt.err (%p1696)

</llo_original>
